<compile_context>
chip_gen: v6e
topology: v6e:2x2x1
jax: 0.10.0
libtpu: 0.0.40
codegen_flags: <defaults>
</compile_context>

<pallas_src>
import jax
import jax.numpy as jnp
from jax.experimental import pallas as pl
from jax.experimental.pallas import tpu as pltpu

B, S, D = 2, 8, 32        # batch, seq len, num_hiddens (= key/query/value size)
H = 4                     # num_heads
DH = D // H               # per-head dim (= 8 -> sublane aligned)
FFN_H = 64                # ffn_num_hiddens
EPS = 1e-5                # torch.nn.LayerNorm default eps


def _layernorm(y, gamma, beta):
    mean = jnp.mean(y, axis=-1, keepdims=True)
    centered = y - mean                                   # reused (no recompute)
    var = jnp.mean(centered * centered, axis=-1, keepdims=True)
    return centered * jax.lax.rsqrt(var + EPS) * gamma + beta


def encoder_block_kernel(vl_ref,            # scalar prefetch: (B,) int32 in SMEM
                         x_ref,             # (S, D) f32 -- slab for batch b
                         wqkv_t_ref,        # (3D, D) f32, [Wq*scale | Wk | Wv]^T
                         wo_ref,            # (D, D) f32
                         w1_ref,            # (D, FFN_H) f32
                         w2_ref,            # (FFN_H, D) f32
                         small_ref,         # (8, 128) f32 packed small params
                         out_ref):          # (S, D) f32
    b = pl.program_id(0)
    x = x_ref[...]                                        # (S, D) f32

    # ---- fused QKV projection, transposed: qkv_t[r, s] = sum_d Wt[r, d] x[s, d]
    #      Per-head slices below are then 8-row sublane slices (tile aligned).
    qkv_t = jax.lax.dot_general(
        wqkv_t_ref[...], x, (((1,), (1,)), ((), ())),
        preferred_element_type=jnp.float32)               # (3D, S)

    # ---- additive key-mask bias for this batch, computed once ----
    vlen = vl_ref[b]
    col = jax.lax.broadcasted_iota(jnp.int32, (1, S), 1)
    bias = jnp.where(col >= vlen, jnp.float32(-1e6), jnp.float32(0.0))  # (1, S)

    wo = wo_ref[...]                                      # (D, D)

    # ---- per-head attention, accumulating through W_O (no concat) ----
    attn = jnp.zeros((S, D), jnp.float32)
    for h in range(H):                                    # static unroll (H=4)
        qh = qkv_t[h * DH:(h + 1) * DH, :]                # (DH, S) sublane slice
        kh = qkv_t[D + h * DH:D + (h + 1) * DH, :]        # (DH, S)
        vh = qkv_t[2 * D + h * DH:2 * D + (h + 1) * DH, :]  # (DH, S)
        # scores[s, t] = sum_d qh[d, s] * kh[d, t]  (scale folded into W_q)
        scores = jax.lax.dot_general(
            qh, kh, (((0,), (0,)), ((), ())),
            preferred_element_type=jnp.float32)           # (S, S)
        scores = scores + bias                            # masked_softmax fill
        scores = scores - jnp.max(scores, axis=-1, keepdims=True)
        p = jnp.exp(scores)
        p = p / jnp.sum(p, axis=-1, keepdims=True)        # exact divide
        # head[s, d] = sum_t p[s, t] * vh[d, t]
        head = jax.lax.dot_general(
            p, vh, (((1,), (1,)), ((), ())),
            preferred_element_type=jnp.float32)           # (S, DH)
        attn = attn + jnp.dot(head, wo[h * DH:(h + 1) * DH, :],
                              preferred_element_type=jnp.float32)

    # ---- unpack the small-parameter slab (all slices at lane offset 0) ----
    sp = small_ref[...]
    g1, be1 = sp[0:1, :D], sp[1:2, :D]
    g2, be2 = sp[2:3, :D], sp[3:4, :D]
    bb2 = sp[4:5, :D]
    bb1 = sp[5:6, :FFN_H]

    # ---- AddNorm 1 (dropout is identity in eval mode) ----
    y = _layernorm(attn + x, g1, be1)

    # ---- PositionWiseFFN ----
    h1 = jnp.dot(y, w1_ref[...], preferred_element_type=jnp.float32) + bb1
    h1 = jnp.maximum(h1, 0.0)
    f = jnp.dot(h1, w2_ref[...], preferred_element_type=jnp.float32) + bb2

    # ---- AddNorm 2 ----
    out_ref[...] = _layernorm(f + y, g2, be2)


def prepare_kernel_params(p):
    """One-time constant folds (not per-call work): fuse W_q|W_k|W_v into a
    single transposed (3D, D) weight with the 1/sqrt(DH) attention scale folded
    into W_q (in f32), and pack the small per-channel params into one slab."""
    scale = 1.0 / jnp.sqrt(jnp.float32(DH))
    wqkv = jnp.concatenate([p["wq"] * scale, p["wk"], p["wv"]], axis=1)  # (D, 3D)
    small = jnp.zeros((8, 128), jnp.float32)
    small = small.at[0, :D].set(p["g1"][0])
    small = small.at[1, :D].set(p["be1"][0])
    small = small.at[2, :D].set(p["g2"][0])
    small = small.at[3, :D].set(p["be2"][0])
    small = small.at[4, :D].set(p["bb2"][0])
    small = small.at[5, :FFN_H].set(p["bb1"][0])
    return {
        "wqkv_t": jnp.transpose(wqkv),                    # (3D, D) f32
        "wo": p["wo"],                                    # (D, D)  f32
        "w1": p["w1"], "w2": p["w2"],                     # FFN weights f32
        "small": small,                                   # (8, 128) f32
    }


def encoder_block(x, valid_lens, kp):
    # Advisory cost for XLA's scheduler (this call is launch-bound).
    flops = B * (2 * S * D * 3 * D                         # fused QKV
                 + H * (2 * S * S * DH                     # scores
                        + 2 * S * S * DH                   # p @ v
                        + 2 * S * DH * D)                  # through W_O
                 + 2 * S * D * FFN_H + 2 * S * FFN_H * D)  # FFN
    transcendentals = B * (H * S * S + 2 * S)
    bytes_accessed = 4 * (2 * B * S * D + 3 * D * D + D * D
                          + 2 * D * FFN_H + 8 * 128) + 4 * B

    const2 = lambda b, vl: (0, 0)                          # weights: resident
    grid_spec = pltpu.PrefetchScalarGridSpec(
        num_scalar_prefetch=1,                             # valid_lens -> SMEM
        grid=(B,),                                         # one step per batch
        in_specs=[
            pl.BlockSpec((None, S, D), lambda b, vl: (b, 0, 0)),   # x slab
            pl.BlockSpec((3 * D, D), const2),
            pl.BlockSpec((D, D), const2),
            pl.BlockSpec((D, FFN_H), const2),
            pl.BlockSpec((FFN_H, D), const2),
            pl.BlockSpec((8, 128), const2),
        ],
        out_specs=pl.BlockSpec((None, S, D), lambda b, vl: (b, 0, 0)),
    )
    out = pl.pallas_call(
        encoder_block_kernel,
        out_shape=jax.ShapeDtypeStruct((B, S, D), jnp.float32),
        grid_spec=grid_spec,
        compiler_params=pltpu.CompilerParams(
            dimension_semantics=("parallel",)),            # v7x: 2 TCs split B
        cost_estimate=pl.CostEstimate(
            flops=flops, transcendentals=transcendentals,
            bytes_accessed=bytes_accessed),
    )(valid_lens, x,
      kp["wqkv_t"], kp["wo"], kp["w1"], kp["w2"], kp["small"])
    return out


def reference(x, valid_lens, p):
    """Pure-JAX f32 reference replicating the PyTorch forward (eval mode)."""
    q, k, v = x @ p["wq"], x @ p["wk"], x @ p["wv"]
    split = lambda t: t.reshape(B, S, H, DH).transpose(0, 2, 1, 3)
    qh, kh, vh = split(q), split(k), split(v)
    scores = jnp.einsum("bhqd,bhkd->bhqk", qh, kh) / jnp.sqrt(jnp.float32(DH))
    mask = jnp.arange(S)[None, None, None, :] >= valid_lens[:, None, None, None]
    scores = jnp.where(mask, -1e6, scores)
    attn = jnp.einsum("bhqk,bhkd->bhqd", jax.nn.softmax(scores, -1), vh)
    attn = attn.transpose(0, 2, 1, 3).reshape(B, S, D) @ p["wo"]

    def ln(t, g, bta):
        m = t.mean(-1, keepdims=True)
        var = ((t - m) ** 2).mean(-1, keepdims=True)
        return (t - m) / jnp.sqrt(var + EPS) * g + bta

    y = ln(attn + x, p["g1"][0], p["be1"][0])
    f = jnp.maximum(y @ p["w1"] + p["bb1"][0], 0.0) @ p["w2"] + p["bb2"][0]
    return ln(f + y, p["g2"][0], p["be2"][0])


def init_params(key):
    ks = jax.random.split(key, 8)
    n = lambda k, shp: (0.02 * jax.random.normal(k, shp)).astype(jnp.float32)
    return {
        "wq": n(ks[0], (D, D)), "wk": n(ks[1], (D, D)),
        "wv": n(ks[2], (D, D)), "wo": n(ks[3], (D, D)),
        "g1": jnp.ones((1, D), jnp.float32), "be1": jnp.zeros((1, D), jnp.float32),
        "w1": n(ks[4], (D, FFN_H)), "bb1": n(ks[5], (1, FFN_H)),
        "w2": n(ks[6], (FFN_H, D)), "bb2": n(ks[7], (1, D)),
        "g2": jnp.ones((1, D), jnp.float32), "be2": jnp.zeros((1, D), jnp.float32),
    }


if __name__ == "__main__":
    key = jax.random.PRNGKey(0)
    kx, kparam = jax.random.split(key)
    x = jax.random.normal(kx, (B, S, D), dtype=jnp.float32)
    valid_lens = jnp.array([3, 8], dtype=jnp.int32)
    params = init_params(kparam)
    kernel_params = prepare_kernel_params(params)

    out = encoder_block(x, valid_lens, kernel_params)
    out = jax.block_until_ready(out)

    ref = reference(x, valid_lens, params)
    assert out.shape == (B, S, D)
    # All compute is f32 now (no bf16 casts, exact softmax divide); 2e-3 kept
    # only to cover possible reduced-precision f32 matmul passes on either
    # side (kernel MXU vs. XLA default) — observed error is far below this.
    assert jnp.allclose(out, ref, atol=2e-3, rtol=2e-3), "mismatch vs reference"
    print("KERNEL_OK")
</pallas_src>

<mosaic_0001>
module attributes {stable_mosaic.version = 11 : i64} {
  func.func @encoder_block_kernel(%arg0: i32, %arg1: memref<2xi32, #tpu.memory_space<smem>>, %arg2: memref<1x8x32xf32, #tpu.memory_space<vmem>>, %arg3: memref<96x32xf32, #tpu.memory_space<vmem>>, %arg4: memref<32x32xf32, #tpu.memory_space<vmem>>, %arg5: memref<32x64xf32, #tpu.memory_space<vmem>>, %arg6: memref<64x32xf32, #tpu.memory_space<vmem>>, %arg7: memref<8x128xf32, #tpu.memory_space<vmem>>, %arg8: memref<1x8x32xf32, #tpu.memory_space<vmem>>) attributes {dimension_semantics = [#tpu.dimension_semantics<parallel>], iteration_bounds = array<i64: 2>, scalar_prefetch = 1 : i64, scratch_operands = 0 : i64, tpu.core_type = #tpu.core_type<tc>, window_params = [{transform_indices = @transform_0, window_bounds = array<i64: 1, 8, 32>}, {pipeline_mode = #tpu.pipeline_mode<synchronous>, transform_indices = @transform_1, window_bounds = array<i64: 96, 32>}, {pipeline_mode = #tpu.pipeline_mode<synchronous>, transform_indices = @transform_2, window_bounds = array<i64: 32, 32>}, {pipeline_mode = #tpu.pipeline_mode<synchronous>, transform_indices = @transform_3, window_bounds = array<i64: 32, 64>}, {pipeline_mode = #tpu.pipeline_mode<synchronous>, transform_indices = @transform_4, window_bounds = array<i64: 64, 32>}, {pipeline_mode = #tpu.pipeline_mode<synchronous>, transform_indices = @transform_5, window_bounds = array<i64: 8, 128>}, {transform_indices = @transform_6, window_bounds = array<i64: 1, 8, 32>}]} {
    %c0 = arith.constant 0 : index
    %c0_0 = arith.constant 0 : index
    %c0_1 = arith.constant 0 : index
    %0 = vector.load %arg2[%c0, %c0_0, %c0_1] : memref<1x8x32xf32, #tpu.memory_space<vmem>>, vector<1x8x32xf32>
    %1 = vector.shape_cast %0 : vector<1x8x32xf32> to vector<8x32xf32>
    %c0_2 = arith.constant 0 : index
    %c0_3 = arith.constant 0 : index
    %2 = vector.load %arg3[%c0_2, %c0_3] : memref<96x32xf32, #tpu.memory_space<vmem>>, vector<96x32xf32>
    %cst = arith.constant dense<0.000000e+00> : vector<96x8xf32>
    %3 = tpu.matmul %2, %1, %cst {dimension_numbers = #tpu.dot_dimension_numbers<[1], [1], [0], [0], [0, 0, 1, 0], [], []>} : vector<96x32xf32>, vector<8x32xf32>, vector<96x8xf32> -> vector<96x8xf32>
    %4 = arith.index_cast %arg0 : i32 to index
    %5 = memref.load %arg1[%4] : memref<2xi32, #tpu.memory_space<smem>>
    %6 = tpu.iota {dimensions = array<i32: 1>} : vector<1x8xi32>
    %7 = vector.broadcast %5 : i32 to vector<1x8xi32>
    %8 = arith.cmpi sge, %6, %7 : vector<1x8xi32>
    %cst_4 = arith.constant -1.000000e+06 : f32
    %cst_5 = arith.constant 0.000000e+00 : f32
    %9 = vector.broadcast %cst_4 : f32 to vector<1x8xf32>
    %10 = vector.broadcast %cst_5 : f32 to vector<1x8xf32>
    %11 = arith.select %8, %9, %10 : vector<1x8xi1>, vector<1x8xf32>
    %c0_6 = arith.constant 0 : index
    %c0_7 = arith.constant 0 : index
    %12 = vector.load %arg4[%c0_6, %c0_7] : memref<32x32xf32, #tpu.memory_space<vmem>>, vector<32x32xf32>
    %cst_8 = arith.constant 0.000000e+00 : f32
    %13 = vector.broadcast %cst_8 : f32 to vector<8x32xf32>
    %14 = vector.extract_strided_slice %3 {offsets = [0, 0], sizes = [8, 8], strides = [1, 1]} : vector<96x8xf32> to vector<8x8xf32>
    %15 = vector.extract_strided_slice %3 {offsets = [32, 0], sizes = [8, 8], strides = [1, 1]} : vector<96x8xf32> to vector<8x8xf32>
    %16 = vector.extract_strided_slice %3 {offsets = [64, 0], sizes = [8, 8], strides = [1, 1]} : vector<96x8xf32> to vector<8x8xf32>
    %cst_9 = arith.constant dense<0.000000e+00> : vector<8x8xf32>
    %17 = tpu.matmul %14, %15, %cst_9 {dimension_numbers = #tpu.dot_dimension_numbers<[0], [0], [1], [1], [0, 1, 1, 1], [], []>} : vector<8x8xf32>, vector<8x8xf32>, vector<8x8xf32> -> vector<8x8xf32>
    %18 = vector.broadcast %11 : vector<1x8xf32> to vector<8x8xf32>
    %19 = arith.addf %17, %18 : vector<8x8xf32>
    %cst_10 = arith.constant dense<0xFF800000> : vector<8xf32>
    %20 = vector.multi_reduction <maximumf>, %19, %cst_10 [1] : vector<8x8xf32> to vector<8xf32>
    %21 = vector.shape_cast %20 : vector<8xf32> to vector<8x1xf32>
    %22 = vector.broadcast %21 : vector<8x1xf32> to vector<8x8xf32>
    %23 = arith.subf %19, %22 : vector<8x8xf32>
    %24 = math.exp %23 : vector<8x8xf32>
    %cst_11 = arith.constant dense<0.000000e+00> : vector<8xf32>
    %25 = vector.multi_reduction <add>, %24, %cst_11 [1] : vector<8x8xf32> to vector<8xf32>
    %26 = vector.shape_cast %25 : vector<8xf32> to vector<8x1xf32>
    %27 = vector.broadcast %26 : vector<8x1xf32> to vector<8x8xf32>
    %28 = arith.divf %24, %27 : vector<8x8xf32>
    %cst_12 = arith.constant dense<0.000000e+00> : vector<8x8xf32>
    %29 = tpu.matmul %28, %16, %cst_12 {dimension_numbers = #tpu.dot_dimension_numbers<[1], [1], [0], [0], [0, 0, 1, 0], [], []>} : vector<8x8xf32>, vector<8x8xf32>, vector<8x8xf32> -> vector<8x8xf32>
    %30 = vector.extract_strided_slice %12 {offsets = [0, 0], sizes = [8, 32], strides = [1, 1]} : vector<32x32xf32> to vector<8x32xf32>
    %cst_13 = arith.constant dense<0.000000e+00> : vector<8x32xf32>
    %31 = tpu.matmul %29, %30, %cst_13 {dimension_numbers = #tpu.dot_dimension_numbers<[1], [0], [0], [1], [0, 0, 1, 1], [], []>} : vector<8x8xf32>, vector<8x32xf32>, vector<8x32xf32> -> vector<8x32xf32>
    %32 = arith.addf %13, %31 : vector<8x32xf32>
    %33 = vector.extract_strided_slice %3 {offsets = [8, 0], sizes = [8, 8], strides = [1, 1]} : vector<96x8xf32> to vector<8x8xf32>
    %34 = vector.extract_strided_slice %3 {offsets = [40, 0], sizes = [8, 8], strides = [1, 1]} : vector<96x8xf32> to vector<8x8xf32>
    %35 = vector.extract_strided_slice %3 {offsets = [72, 0], sizes = [8, 8], strides = [1, 1]} : vector<96x8xf32> to vector<8x8xf32>
    %cst_14 = arith.constant dense<0.000000e+00> : vector<8x8xf32>
    %36 = tpu.matmul %33, %34, %cst_14 {dimension_numbers = #tpu.dot_dimension_numbers<[0], [0], [1], [1], [0, 1, 1, 1], [], []>} : vector<8x8xf32>, vector<8x8xf32>, vector<8x8xf32> -> vector<8x8xf32>
    %37 = vector.broadcast %11 : vector<1x8xf32> to vector<8x8xf32>
    %38 = arith.addf %36, %37 : vector<8x8xf32>
    %cst_15 = arith.constant dense<0xFF800000> : vector<8xf32>
    %39 = vector.multi_reduction <maximumf>, %38, %cst_15 [1] : vector<8x8xf32> to vector<8xf32>
    %40 = vector.shape_cast %39 : vector<8xf32> to vector<8x1xf32>
    %41 = vector.broadcast %40 : vector<8x1xf32> to vector<8x8xf32>
    %42 = arith.subf %38, %41 : vector<8x8xf32>
    %43 = math.exp %42 : vector<8x8xf32>
    %cst_16 = arith.constant dense<0.000000e+00> : vector<8xf32>
    %44 = vector.multi_reduction <add>, %43, %cst_16 [1] : vector<8x8xf32> to vector<8xf32>
    %45 = vector.shape_cast %44 : vector<8xf32> to vector<8x1xf32>
    %46 = vector.broadcast %45 : vector<8x1xf32> to vector<8x8xf32>
    %47 = arith.divf %43, %46 : vector<8x8xf32>
    %cst_17 = arith.constant dense<0.000000e+00> : vector<8x8xf32>
    %48 = tpu.matmul %47, %35, %cst_17 {dimension_numbers = #tpu.dot_dimension_numbers<[1], [1], [0], [0], [0, 0, 1, 0], [], []>} : vector<8x8xf32>, vector<8x8xf32>, vector<8x8xf32> -> vector<8x8xf32>
    %49 = vector.extract_strided_slice %12 {offsets = [8, 0], sizes = [8, 32], strides = [1, 1]} : vector<32x32xf32> to vector<8x32xf32>
    %cst_18 = arith.constant dense<0.000000e+00> : vector<8x32xf32>
    %50 = tpu.matmul %48, %49, %cst_18 {dimension_numbers = #tpu.dot_dimension_numbers<[1], [0], [0], [1], [0, 0, 1, 1], [], []>} : vector<8x8xf32>, vector<8x32xf32>, vector<8x32xf32> -> vector<8x32xf32>
    %51 = arith.addf %32, %50 : vector<8x32xf32>
    %52 = vector.extract_strided_slice %3 {offsets = [16, 0], sizes = [8, 8], strides = [1, 1]} : vector<96x8xf32> to vector<8x8xf32>
    %53 = vector.extract_strided_slice %3 {offsets = [48, 0], sizes = [8, 8], strides = [1, 1]} : vector<96x8xf32> to vector<8x8xf32>
    %54 = vector.extract_strided_slice %3 {offsets = [80, 0], sizes = [8, 8], strides = [1, 1]} : vector<96x8xf32> to vector<8x8xf32>
    %cst_19 = arith.constant dense<0.000000e+00> : vector<8x8xf32>
    %55 = tpu.matmul %52, %53, %cst_19 {dimension_numbers = #tpu.dot_dimension_numbers<[0], [0], [1], [1], [0, 1, 1, 1], [], []>} : vector<8x8xf32>, vector<8x8xf32>, vector<8x8xf32> -> vector<8x8xf32>
    %56 = vector.broadcast %11 : vector<1x8xf32> to vector<8x8xf32>
    %57 = arith.addf %55, %56 : vector<8x8xf32>
    %cst_20 = arith.constant dense<0xFF800000> : vector<8xf32>
    %58 = vector.multi_reduction <maximumf>, %57, %cst_20 [1] : vector<8x8xf32> to vector<8xf32>
    %59 = vector.shape_cast %58 : vector<8xf32> to vector<8x1xf32>
    %60 = vector.broadcast %59 : vector<8x1xf32> to vector<8x8xf32>
    %61 = arith.subf %57, %60 : vector<8x8xf32>
    %62 = math.exp %61 : vector<8x8xf32>
    %cst_21 = arith.constant dense<0.000000e+00> : vector<8xf32>
    %63 = vector.multi_reduction <add>, %62, %cst_21 [1] : vector<8x8xf32> to vector<8xf32>
    %64 = vector.shape_cast %63 : vector<8xf32> to vector<8x1xf32>
    %65 = vector.broadcast %64 : vector<8x1xf32> to vector<8x8xf32>
    %66 = arith.divf %62, %65 : vector<8x8xf32>
    %cst_22 = arith.constant dense<0.000000e+00> : vector<8x8xf32>
    %67 = tpu.matmul %66, %54, %cst_22 {dimension_numbers = #tpu.dot_dimension_numbers<[1], [1], [0], [0], [0, 0, 1, 0], [], []>} : vector<8x8xf32>, vector<8x8xf32>, vector<8x8xf32> -> vector<8x8xf32>
    %68 = vector.extract_strided_slice %12 {offsets = [16, 0], sizes = [8, 32], strides = [1, 1]} : vector<32x32xf32> to vector<8x32xf32>
    %cst_23 = arith.constant dense<0.000000e+00> : vector<8x32xf32>
    %69 = tpu.matmul %67, %68, %cst_23 {dimension_numbers = #tpu.dot_dimension_numbers<[1], [0], [0], [1], [0, 0, 1, 1], [], []>} : vector<8x8xf32>, vector<8x32xf32>, vector<8x32xf32> -> vector<8x32xf32>
    %70 = arith.addf %51, %69 : vector<8x32xf32>
    %71 = vector.extract_strided_slice %3 {offsets = [24, 0], sizes = [8, 8], strides = [1, 1]} : vector<96x8xf32> to vector<8x8xf32>
    %72 = vector.extract_strided_slice %3 {offsets = [56, 0], sizes = [8, 8], strides = [1, 1]} : vector<96x8xf32> to vector<8x8xf32>
    %73 = vector.extract_strided_slice %3 {offsets = [88, 0], sizes = [8, 8], strides = [1, 1]} : vector<96x8xf32> to vector<8x8xf32>
    %cst_24 = arith.constant dense<0.000000e+00> : vector<8x8xf32>
    %74 = tpu.matmul %71, %72, %cst_24 {dimension_numbers = #tpu.dot_dimension_numbers<[0], [0], [1], [1], [0, 1, 1, 1], [], []>} : vector<8x8xf32>, vector<8x8xf32>, vector<8x8xf32> -> vector<8x8xf32>
    %75 = vector.broadcast %11 : vector<1x8xf32> to vector<8x8xf32>
    %76 = arith.addf %74, %75 : vector<8x8xf32>
    %cst_25 = arith.constant dense<0xFF800000> : vector<8xf32>
    %77 = vector.multi_reduction <maximumf>, %76, %cst_25 [1] : vector<8x8xf32> to vector<8xf32>
    %78 = vector.shape_cast %77 : vector<8xf32> to vector<8x1xf32>
    %79 = vector.broadcast %78 : vector<8x1xf32> to vector<8x8xf32>
    %80 = arith.subf %76, %79 : vector<8x8xf32>
    %81 = math.exp %80 : vector<8x8xf32>
    %cst_26 = arith.constant dense<0.000000e+00> : vector<8xf32>
    %82 = vector.multi_reduction <add>, %81, %cst_26 [1] : vector<8x8xf32> to vector<8xf32>
    %83 = vector.shape_cast %82 : vector<8xf32> to vector<8x1xf32>
    %84 = vector.broadcast %83 : vector<8x1xf32> to vector<8x8xf32>
    %85 = arith.divf %81, %84 : vector<8x8xf32>
    %cst_27 = arith.constant dense<0.000000e+00> : vector<8x8xf32>
    %86 = tpu.matmul %85, %73, %cst_27 {dimension_numbers = #tpu.dot_dimension_numbers<[1], [1], [0], [0], [0, 0, 1, 0], [], []>} : vector<8x8xf32>, vector<8x8xf32>, vector<8x8xf32> -> vector<8x8xf32>
    %87 = vector.extract_strided_slice %12 {offsets = [24, 0], sizes = [8, 32], strides = [1, 1]} : vector<32x32xf32> to vector<8x32xf32>
    %cst_28 = arith.constant dense<0.000000e+00> : vector<8x32xf32>
    %88 = tpu.matmul %86, %87, %cst_28 {dimension_numbers = #tpu.dot_dimension_numbers<[1], [0], [0], [1], [0, 0, 1, 1], [], []>} : vector<8x8xf32>, vector<8x32xf32>, vector<8x32xf32> -> vector<8x32xf32>
    %89 = arith.addf %70, %88 : vector<8x32xf32>
    %c0_29 = arith.constant 0 : index
    %c0_30 = arith.constant 0 : index
    %90 = vector.load %arg7[%c0_29, %c0_30] : memref<8x128xf32, #tpu.memory_space<vmem>>, vector<8x128xf32>
    %91 = vector.extract_strided_slice %90 {offsets = [0, 0], sizes = [1, 32], strides = [1, 1]} : vector<8x128xf32> to vector<1x32xf32>
    %92 = vector.extract_strided_slice %90 {offsets = [1, 0], sizes = [1, 32], strides = [1, 1]} : vector<8x128xf32> to vector<1x32xf32>
    %93 = vector.extract_strided_slice %90 {offsets = [2, 0], sizes = [1, 32], strides = [1, 1]} : vector<8x128xf32> to vector<1x32xf32>
    %94 = vector.extract_strided_slice %90 {offsets = [3, 0], sizes = [1, 32], strides = [1, 1]} : vector<8x128xf32> to vector<1x32xf32>
    %95 = vector.extract_strided_slice %90 {offsets = [4, 0], sizes = [1, 32], strides = [1, 1]} : vector<8x128xf32> to vector<1x32xf32>
    %96 = vector.extract_strided_slice %90 {offsets = [5, 0], sizes = [1, 64], strides = [1, 1]} : vector<8x128xf32> to vector<1x64xf32>
    %97 = arith.addf %89, %1 : vector<8x32xf32>
    %cst_31 = arith.constant dense<0.000000e+00> : vector<8xf32>
    %98 = vector.multi_reduction <add>, %97, %cst_31 [1] : vector<8x32xf32> to vector<8xf32>
    %99 = vector.shape_cast %98 : vector<8xf32> to vector<8x1xf32>
    %cst_32 = arith.constant 3.200000e+01 : f32
    %100 = vector.broadcast %cst_32 : f32 to vector<8x1xf32>
    %101 = arith.divf %99, %100 : vector<8x1xf32>
    %102 = vector.broadcast %101 : vector<8x1xf32> to vector<8x32xf32>
    %103 = arith.subf %97, %102 : vector<8x32xf32>
    %104 = arith.mulf %103, %103 : vector<8x32xf32>
    %cst_33 = arith.constant dense<0.000000e+00> : vector<8xf32>
    %105 = vector.multi_reduction <add>, %104, %cst_33 [1] : vector<8x32xf32> to vector<8xf32>
    %106 = vector.shape_cast %105 : vector<8xf32> to vector<8x1xf32>
    %cst_34 = arith.constant 3.200000e+01 : f32
    %107 = vector.broadcast %cst_34 : f32 to vector<8x1xf32>
    %108 = arith.divf %106, %107 : vector<8x1xf32>
    %cst_35 = arith.constant 9.99999974E-6 : f32
    %109 = vector.broadcast %cst_35 : f32 to vector<8x1xf32>
    %110 = arith.addf %108, %109 : vector<8x1xf32>
    %111 = math.rsqrt %110 : vector<8x1xf32>
    %112 = vector.broadcast %111 : vector<8x1xf32> to vector<8x32xf32>
    %113 = arith.mulf %103, %112 : vector<8x32xf32>
    %114 = vector.broadcast %91 : vector<1x32xf32> to vector<8x32xf32>
    %115 = arith.mulf %113, %114 : vector<8x32xf32>
    %116 = vector.broadcast %92 : vector<1x32xf32> to vector<8x32xf32>
    %117 = arith.addf %115, %116 : vector<8x32xf32>
    %c0_36 = arith.constant 0 : index
    %c0_37 = arith.constant 0 : index
    %118 = vector.load %arg5[%c0_36, %c0_37] : memref<32x64xf32, #tpu.memory_space<vmem>>, vector<32x64xf32>
    %cst_38 = arith.constant dense<0.000000e+00> : vector<8x64xf32>
    %119 = tpu.matmul %117, %118, %cst_38 {dimension_numbers = #tpu.dot_dimension_numbers<[1], [0], [0], [1], [0, 0, 1, 1], [], []>} : vector<8x32xf32>, vector<32x64xf32>, vector<8x64xf32> -> vector<8x64xf32>
    %120 = vector.broadcast %96 : vector<1x64xf32> to vector<8x64xf32>
    %121 = arith.addf %119, %120 : vector<8x64xf32>
    %cst_39 = arith.constant 0.000000e+00 : f32
    %122 = vector.broadcast %cst_39 : f32 to vector<8x64xf32>
    %123 = arith.maximumf %121, %122 : vector<8x64xf32>
    %c0_40 = arith.constant 0 : index
    %c0_41 = arith.constant 0 : index
    %124 = vector.load %arg6[%c0_40, %c0_41] : memref<64x32xf32, #tpu.memory_space<vmem>>, vector<64x32xf32>
    %cst_42 = arith.constant dense<0.000000e+00> : vector<8x32xf32>
    %125 = tpu.matmul %123, %124, %cst_42 {dimension_numbers = #tpu.dot_dimension_numbers<[1], [0], [0], [1], [0, 0, 1, 1], [], []>} : vector<8x64xf32>, vector<64x32xf32>, vector<8x32xf32> -> vector<8x32xf32>
    %126 = vector.broadcast %95 : vector<1x32xf32> to vector<8x32xf32>
    %127 = arith.addf %125, %126 : vector<8x32xf32>
    %128 = arith.addf %127, %117 : vector<8x32xf32>
    %cst_43 = arith.constant dense<0.000000e+00> : vector<8xf32>
    %129 = vector.multi_reduction <add>, %128, %cst_43 [1] : vector<8x32xf32> to vector<8xf32>
    %130 = vector.shape_cast %129 : vector<8xf32> to vector<8x1xf32>
    %cst_44 = arith.constant 3.200000e+01 : f32
    %131 = vector.broadcast %cst_44 : f32 to vector<8x1xf32>
    %132 = arith.divf %130, %131 : vector<8x1xf32>
    %133 = vector.broadcast %132 : vector<8x1xf32> to vector<8x32xf32>
    %134 = arith.subf %128, %133 : vector<8x32xf32>
    %135 = arith.mulf %134, %134 : vector<8x32xf32>
    %cst_45 = arith.constant dense<0.000000e+00> : vector<8xf32>
    %136 = vector.multi_reduction <add>, %135, %cst_45 [1] : vector<8x32xf32> to vector<8xf32>
    %137 = vector.shape_cast %136 : vector<8xf32> to vector<8x1xf32>
    %cst_46 = arith.constant 3.200000e+01 : f32
    %138 = vector.broadcast %cst_46 : f32 to vector<8x1xf32>
    %139 = arith.divf %137, %138 : vector<8x1xf32>
    %cst_47 = arith.constant 9.99999974E-6 : f32
    %140 = vector.broadcast %cst_47 : f32 to vector<8x1xf32>
    %141 = arith.addf %139, %140 : vector<8x1xf32>
    %142 = math.rsqrt %141 : vector<8x1xf32>
    %143 = vector.broadcast %142 : vector<8x1xf32> to vector<8x32xf32>
    %144 = arith.mulf %134, %143 : vector<8x32xf32>
    %145 = vector.broadcast %93 : vector<1x32xf32> to vector<8x32xf32>
    %146 = arith.mulf %144, %145 : vector<8x32xf32>
    %147 = vector.broadcast %94 : vector<1x32xf32> to vector<8x32xf32>
    %148 = arith.addf %146, %147 : vector<8x32xf32>
    %c0_48 = arith.constant 0 : index
    %c0_49 = arith.constant 0 : index
    %c0_50 = arith.constant 0 : index
    %149 = vector.load %arg8[%c0_48, %c0_49, %c0_50] : memref<1x8x32xf32, #tpu.memory_space<vmem>>, vector<1x8x32xf32>
    %150 = vector.shape_cast %149 : vector<1x8x32xf32> to vector<8x32xf32>
    %151 = vector.shape_cast %148 : vector<8x32xf32> to vector<1x8x32xf32>
    tpu.vector_store %arg8[%c0_48, %c0_49, %c0_50], %151 {strides = array<i32>} : memref<1x8x32xf32, #tpu.memory_space<vmem>>, vector<1x8x32xf32>,
    return
  }
  func.func @transform_0(%arg0: i32, %arg1: memref<2xi32, #tpu.memory_space<smem>>) -> (i32, i32, i32) {
    %c0_i32 = arith.constant 0 : i32
    %c0_i32_0 = arith.constant 0 : i32
    %c0_i32_1 = arith.constant 0 : i32
    return %arg0, %c0_i32, %c0_i32_0 : i32, i32, i32
  }
  func.func @transform_1(%arg0: i32, %arg1: memref<2xi32, #tpu.memory_space<smem>>) -> (i32, i32) {
    %c0_i32 = arith.constant 0 : i32
    %c0_i32_0 = arith.constant 0 : i32
    %c0_i32_1 = arith.constant 0 : i32
    return %c0_i32, %c0_i32_0 : i32, i32
  }
  func.func @transform_2(%arg0: i32, %arg1: memref<2xi32, #tpu.memory_space<smem>>) -> (i32, i32) {
    %c0_i32 = arith.constant 0 : i32
    %c0_i32_0 = arith.constant 0 : i32
    %c0_i32_1 = arith.constant 0 : i32
    return %c0_i32, %c0_i32_0 : i32, i32
  }
  func.func @transform_3(%arg0: i32, %arg1: memref<2xi32, #tpu.memory_space<smem>>) -> (i32, i32) {
    %c0_i32 = arith.constant 0 : i32
    %c0_i32_0 = arith.constant 0 : i32
    %c0_i32_1 = arith.constant 0 : i32
    return %c0_i32, %c0_i32_0 : i32, i32
  }
  func.func @transform_4(%arg0: i32, %arg1: memref<2xi32, #tpu.memory_space<smem>>) -> (i32, i32) {
    %c0_i32 = arith.constant 0 : i32
    %c0_i32_0 = arith.constant 0 : i32
    %c0_i32_1 = arith.constant 0 : i32
    return %c0_i32, %c0_i32_0 : i32, i32
  }
  func.func @transform_5(%arg0: i32, %arg1: memref<2xi32, #tpu.memory_space<smem>>) -> (i32, i32) {
    %c0_i32 = arith.constant 0 : i32
    %c0_i32_0 = arith.constant 0 : i32
    %c0_i32_1 = arith.constant 0 : i32
    return %c0_i32, %c0_i32_0 : i32, i32
  }
  func.func @transform_6(%arg0: i32, %arg1: memref<2xi32, #tpu.memory_space<smem>>) -> (i32, i32, i32) {
    %c0_i32 = arith.constant 0 : i32
    %c0_i32_0 = arith.constant 0 : i32
    %c0_i32_1 = arith.constant 0 : i32
    return %arg0, %c0_i32, %c0_i32_0 : i32, i32, i32
  }
}

</mosaic_0001>

<llo_original>
// kernel: tpu_custom_call.1
$region0: #{tpu_custom_call.1}
  #allocation0 [shape = 'u32[]', space=smem, size = 0x4, offset = 0x4, fixed_abs, tag = 'smem constant byte address 0x4 - core index']
  #allocation1 [shape = 'u32[144,128]{1,0:T(1,128)}', space=vmem, size = 0x12000, scoped, tag = 'internal scratch']
  #allocation2 [shape = 's32[1]{0}', space=sflag, size = 0x4, scoped, tag = 'scoped memory for tpu_custom_call.1']
  #allocation3 [shape = 'u8[512]{0}', space=smem, size = 0x200, scoped, tag = 'prefetched SMEM operand 0']
  %s0 = inlined_call_operand.vmem [shape: s32[2], index: 0, kind: input, shape index: {}]
  %s1 = inlined_call_operand.vmem [shape: f32[2,8,32], index: 1, kind: input, shape index: {}]
  %s2 = inlined_call_operand.vmem [shape: f32[96,32], index: 2, kind: input, shape index: {}]
  %s3 = inlined_call_operand.vmem [shape: f32[32,32], index: 3, kind: input, shape index: {}]
  %s4 = inlined_call_operand.vmem [shape: f32[32,64], index: 4, kind: input, shape index: {}]
  %s5 = inlined_call_operand.vmem [shape: f32[64,32], index: 5, kind: input, shape index: {}]
  %s6 = inlined_call_operand.vmem [shape: f32[8,128], index: 6, kind: input, shape index: {}]
  %s7 = inlined_call_operand.hbm [shape: f32[2,8,32], index: 7, kind: output, shape index: {}]
  %s8 = sld [smem:[#allocation0]]
  $region57: #{tpu_custom_call.1} parent=0
    _
  %s10 = ssub.s32 1, %s8
  %s11 = scalar_select 0, %s10, %s8
  %s12 = sshll.u32 %s0, 4
  %s13 = int_to_ptr.vmem [resolvable:$true] %s12
  %15 = dma.vmem_to_smem %s13, 16, [#allocation3], [#allocation2]
  %16 = dma.done [#allocation2], 16
  %17 = sfence
  $region1: #{tpu_custom_call.1} parent=0
    #allocation4 [shape = 'u8[8192]{0}', space=vmem, size = 0x2000, scoped, tag = 'output window, operand 0']
    #allocation5 [shape = 's32[2]{0}', space=sflag, size = 0x8, scoped, tag = 'scoped memory for tpu_custom_call.1']
    %18 = vsyncpa [#allocation5], 0
    %s19 = scalar_lea.sflag [#allocation5], 1
    %20 = vsyncpa %s19, 0
    loop: start=0, step=1, limit=4
    $region2: #{tpu_custom_call.1} parent=1 // loop_pre_header
      _
    $region3: #{tpu_custom_call.1} parent=1 // loop_header
      %s22 = sphi 0, %s26
      %p23 = scmp.ge.s32.totalorder %s22, 4
      %s32 = sphi 0, %s34
      %s35 = sphi 0, %s32
      %s36 = sphi 0, %s35
      %s52 = sphi 0, %s36
      %s56 = sphi 0, %s56
      %s58 = sphi 0, %s56
      %s59 = sphi 0, %s58
      %s73 = sphi 0, %s59
      %s77 = sphi 0, %s77
      %s79 = sphi 0, %s77
      %s80 = sphi 0, %s79
      %s94 = sphi 0, %s80
      %s98 = sphi 0, %s98
      %s100 = sphi 0, %s98
      %s101 = sphi 0, %s100
      %s115 = sphi 0, %s101
      %s119 = sphi 0, %s119
      %s121 = sphi 0, %s119
      %s122 = sphi 0, %s121
      %s136 = sphi 0, %s122
      %s140 = sphi 0, %s140
      %s142 = sphi 0, %s140
      %s143 = sphi 0, %s142
      %s157 = sphi 0, %s143
      %s163 = sphi 0, %s165
      %s166 = sphi 0, %s163
      %s167 = sphi 0, %s166
      %s183 = sphi 0, %s167
    $region4: #{tpu_custom_call.1} parent=1 // loop_header_branch
      %25 = sbr.rel (%p23) target = $region8
    $region5: #{tpu_custom_call.1} parent=1 // loop_body
      %s27 = ssub.s32 %s22, 1
      %s28 = ssub.s32 %s22, 2
      %s29 = sadd.s32 %s22, 1
      %s30 = ssub.s32 %s22, %s29
      %p31 = scmp.eq.s32.totalorder %s30, 0
      %s33 = sadd.s32 %s32, 1
      %s34 = scalar_select %p31, %s32, %s33
      %p37 = pneg %p31
      %p38 = scmp.eq.s32.totalorder %s22, 1
      %p39 = por %p37, %p38
      %p40 = scmp.ne.s32.totalorder %s32, %s35
      %p41 = scmp.eq.s32.totalorder %s22, 0
      %p42 = por %p40, %p41
      %p43 = scmp.ne.s32.totalorder %s32, %s35
      %p44 = scmp.eq.s32.totalorder %s27, 1
      %p45 = por %p43, %p44
      %p46 = scmp.ne.s32.totalorder %s35, %s36
      %p47 = scmp.eq.s32.totalorder %s27, 0
      %p48 = por %p46, %p47
      %p49 = scmp.ne.s32.totalorder %s35, %s36
      %p50 = scmp.eq.s32.totalorder %s28, 1
      %p51 = por %p49, %p50
      %p53 = scmp.ne.s32.totalorder %s36, %s52
      %p54 = scmp.eq.s32.totalorder %s28, 0
      %p55 = por %p53, %p54
      %s57 = sadd.s32 %s56, 1
      %p60 = scmp.eq.s32.totalorder %s22, 1
      %p61 = scmp.ne.s32.totalorder %s56, %s58
      %p62 = scmp.eq.s32.totalorder %s22, 0
      %p63 = por %p61, %p62
      %p64 = scmp.ne.s32.totalorder %s56, %s58
      %p65 = scmp.eq.s32.totalorder %s27, 1
      %p66 = por %p64, %p65
      %p67 = scmp.ne.s32.totalorder %s58, %s59
      %p68 = scmp.eq.s32.totalorder %s27, 0
      %p69 = por %p67, %p68
      %p70 = scmp.ne.s32.totalorder %s58, %s59
      %p71 = scmp.eq.s32.totalorder %s28, 1
      %p72 = por %p70, %p71
      %p74 = scmp.ne.s32.totalorder %s59, %s73
      %p75 = scmp.eq.s32.totalorder %s28, 0
      %p76 = por %p74, %p75
      %s78 = sadd.s32 %s77, 1
      %p81 = scmp.eq.s32.totalorder %s22, 1
      %p82 = scmp.ne.s32.totalorder %s77, %s79
      %p83 = scmp.eq.s32.totalorder %s22, 0
      %p84 = por %p82, %p83
      %p85 = scmp.ne.s32.totalorder %s77, %s79
      %p86 = scmp.eq.s32.totalorder %s27, 1
      %p87 = por %p85, %p86
      %p88 = scmp.ne.s32.totalorder %s79, %s80
      %p89 = scmp.eq.s32.totalorder %s27, 0
      %p90 = por %p88, %p89
      %p91 = scmp.ne.s32.totalorder %s79, %s80
      %p92 = scmp.eq.s32.totalorder %s28, 1
      %p93 = por %p91, %p92
      %p95 = scmp.ne.s32.totalorder %s80, %s94
      %p96 = scmp.eq.s32.totalorder %s28, 0
      %p97 = por %p95, %p96
      %s99 = sadd.s32 %s98, 1
      %p102 = scmp.eq.s32.totalorder %s22, 1
      %p103 = scmp.ne.s32.totalorder %s98, %s100
      %p104 = scmp.eq.s32.totalorder %s22, 0
      %p105 = por %p103, %p104
      %p106 = scmp.ne.s32.totalorder %s98, %s100
      %p107 = scmp.eq.s32.totalorder %s27, 1
      %p108 = por %p106, %p107
      %p109 = scmp.ne.s32.totalorder %s100, %s101
      %p110 = scmp.eq.s32.totalorder %s27, 0
      %p111 = por %p109, %p110
      %p112 = scmp.ne.s32.totalorder %s100, %s101
      %p113 = scmp.eq.s32.totalorder %s28, 1
      %p114 = por %p112, %p113
      %p116 = scmp.ne.s32.totalorder %s101, %s115
      %p117 = scmp.eq.s32.totalorder %s28, 0
      %p118 = por %p116, %p117
      %s120 = sadd.s32 %s119, 1
      %p123 = scmp.eq.s32.totalorder %s22, 1
      %p124 = scmp.ne.s32.totalorder %s119, %s121
      %p125 = scmp.eq.s32.totalorder %s22, 0
      %p126 = por %p124, %p125
      %p127 = scmp.ne.s32.totalorder %s119, %s121
      %p128 = scmp.eq.s32.totalorder %s27, 1
      %p129 = por %p127, %p128
      %p130 = scmp.ne.s32.totalorder %s121, %s122
      %p131 = scmp.eq.s32.totalorder %s27, 0
      %p132 = por %p130, %p131
      %p133 = scmp.ne.s32.totalorder %s121, %s122
      %p134 = scmp.eq.s32.totalorder %s28, 1
      %p135 = por %p133, %p134
      %p137 = scmp.ne.s32.totalorder %s122, %s136
      %p138 = scmp.eq.s32.totalorder %s28, 0
      %p139 = por %p137, %p138
      %s141 = sadd.s32 %s140, 1
      %p144 = scmp.eq.s32.totalorder %s22, 1
      %p145 = scmp.ne.s32.totalorder %s140, %s142
      %p146 = scmp.eq.s32.totalorder %s22, 0
      %p147 = por %p145, %p146
      %p148 = scmp.ne.s32.totalorder %s140, %s142
      %p149 = scmp.eq.s32.totalorder %s27, 1
      %p150 = por %p148, %p149
      %p151 = scmp.ne.s32.totalorder %s142, %s143
      %p152 = scmp.eq.s32.totalorder %s27, 0
      %p153 = por %p151, %p152
      %p154 = scmp.ne.s32.totalorder %s142, %s143
      %p155 = scmp.eq.s32.totalorder %s28, 1
      %p156 = por %p154, %p155
      %p158 = scmp.ne.s32.totalorder %s143, %s157
      %p159 = scmp.eq.s32.totalorder %s28, 0
      %p160 = por %p158, %p159
      %s161 = ssub.s32 %s22, %s29
      %p162 = scmp.eq.s32.totalorder %s161, 0
      %s164 = sadd.s32 %s163, 1
      %s165 = scalar_select %p162, %s163, %s164
      %p168 = pneg %p162
      %p169 = scmp.eq.s32.totalorder %s22, 1
      %p170 = por %p168, %p169
      %p171 = scmp.ne.s32.totalorder %s163, %s166
      %p172 = scmp.eq.s32.totalorder %s22, 0
      %p173 = por %p171, %p172
      %p174 = scmp.ne.s32.totalorder %s163, %s166
      %p175 = scmp.eq.s32.totalorder %s27, 1
      %p176 = por %p174, %p175
      %p177 = scmp.ne.s32.totalorder %s166, %s167
      %p178 = scmp.eq.s32.totalorder %s27, 0
      %p179 = por %p177, %p178
      %p180 = scmp.ne.s32.totalorder %s166, %s167
      %p181 = scmp.eq.s32.totalorder %s28, 1
      %p182 = por %p180, %p181
      %p184 = scmp.ne.s32.totalorder %s167, %s183
      %p185 = scmp.eq.s32.totalorder %s28, 0
      %p186 = por %p184, %p185
      %p187 = scmp.le.s32.totalorder 1, %s22
      %p188 = scmp.lt.s32.totalorder %s22, 3
      %p189 = pnand %p187, %p188
      %p190 = pneg %p189
      // Predicated region
      $region9: #{tpu_custom_call.1} parent=5 // pred_check
        _
      $region10: #{tpu_custom_call.1} parent=5 // pred_check_branch
        %192 = sbr.rel (%p189) target = $region12
      $region11: #{tpu_custom_call.1} parent=5 // pred_region
        %s193 = ssub.s32 %s22, 1
        // Predicated region
        $region13: #{tpu_custom_call.1} parent=11 // pred_check
          %p194 = pneg %p69
        $region14: #{tpu_custom_call.1} parent=11 // pred_check_branch
          %196 = sbr.rel (%p194) target = $region16
        $region15: #{tpu_custom_call.1} parent=11 // pred_region
          _
        $region16: #{tpu_custom_call.1} parent=11 // pred_fallthru
          _
        // Predicated region
        $region17: #{tpu_custom_call.1} parent=11 // pred_check
          %p197 = pneg %p90
        $region18: #{tpu_custom_call.1} parent=11 // pred_check_branch
          %199 = sbr.rel (%p197) target = $region20
        $region19: #{tpu_custom_call.1} parent=11 // pred_region
          _
        $region20: #{tpu_custom_call.1} parent=11 // pred_fallthru
          _
        // Predicated region
        $region21: #{tpu_custom_call.1} parent=11 // pred_check
          %p200 = pneg %p111
        $region22: #{tpu_custom_call.1} parent=11 // pred_check_branch
          %202 = sbr.rel (%p200) target = $region24
        $region23: #{tpu_custom_call.1} parent=11 // pred_region
          _
        $region24: #{tpu_custom_call.1} parent=11 // pred_fallthru
          _
        // Predicated region
        $region25: #{tpu_custom_call.1} parent=11 // pred_check
          %p203 = pneg %p132
        $region26: #{tpu_custom_call.1} parent=11 // pred_check_branch
          %205 = sbr.rel (%p203) target = $region28
        $region27: #{tpu_custom_call.1} parent=11 // pred_region
          _
        $region28: #{tpu_custom_call.1} parent=11 // pred_fallthru
          _
        // Predicated region
        $region29: #{tpu_custom_call.1} parent=11 // pred_check
          %p206 = pneg %p153
        $region30: #{tpu_custom_call.1} parent=11 // pred_check_branch
          %208 = sbr.rel (%p206) target = $region32
        $region31: #{tpu_custom_call.1} parent=11 // pred_region
          _
        $region32: #{tpu_custom_call.1} parent=11 // pred_fallthru
          _
      $region12: #{tpu_custom_call.1} parent=5 // pred_fallthru
        _
      %p209 = scmp.lt.s32.totalorder %s22, 2
      // Predicated region
      $region33: #{tpu_custom_call.1} parent=5 // pred_check
        %p210 = pneg %p209
      $region34: #{tpu_custom_call.1} parent=5 // pred_check_branch
        %212 = sbr.rel (%p210) target = $region36
      $region35: #{tpu_custom_call.1} parent=5 // pred_region
        // Predicated region
        $region37: #{tpu_custom_call.1} parent=35 // pred_check
          %p213 = pneg %p42
        $region38: #{tpu_custom_call.1} parent=35 // pred_check_branch
          %215 = sbr.rel (%p213) target = $region40
        $region39: #{tpu_custom_call.1} parent=35 // pred_region
          %p216 = scmp.lt.s32.totalorder %s22, 1
          %s217 = scalar_select %p216, %s22, 1
          %s218 = smul.addr %s217, 8
          %s219 = scalar_lea.vmem %s1, %s218
        $region40: #{tpu_custom_call.1} parent=35 // pred_fallthru
          _
      $region36: #{tpu_custom_call.1} parent=5 // pred_fallthru
        _
      %p220 = scmp.le.s32.totalorder 1, %s22
      %p221 = scmp.lt.s32.totalorder %s22, 3
      %p222 = pnand %p220, %p221
      %p223 = pneg %p222
      // Predicated region
      $region41: #{tpu_custom_call.1} parent=5 // pred_check
        _
      $region42: #{tpu_custom_call.1} parent=5 // pred_check_branch
        %225 = sbr.rel (%p222) target = $region44
      $region43: #{tpu_custom_call.1} parent=5 // pred_region
        %s226 = ssub.s32 %s22, 1
        %p227 = scmp.lt.s32.totalorder %s27, 1
        %s228 = scalar_select %p227, %s27, 1
        %s229 = smul.addr %s228, 8
        %s230 = scalar_lea.vmem %s1, %s229
        %p231 = pneg %p48
        %p232 = pneg %p45
        %p233 = pneg %p69
        %p234 = pneg %p66
        %p235 = pneg %p90
        %p236 = pneg %p87
        %p237 = pneg %p111
        %p238 = pneg %p108
        %p239 = pneg %p132
        %p240 = pneg %p129
        %p241 = pneg %p153
        %p242 = pneg %p150
        %p243 = pneg %p179
        %p244 = pneg %p176
        %s245 = sand.u32 %s166, 1
        %s246 = scalar_lea.sflag [#allocation5], %s245
        %s247 = sand.u32 %s166, 1
        %s248 = smul.addr %s247, 8
        %s249 = scalar_lea.vmem [#allocation4], %s248
        %p250 = scmp.lt.s32.totalorder %s27, 1
        %s251 = scalar_select %p250, %s27, 1
        %s252 = smul.addr %s251, 8
        %s253 = scalar_lea.vmem %s1, %s252
        %v254 = vld [vmem:[%s253] sm:$0xff]
        %v255 = vld [vmem:[%s2] sm:$0xff]
        %v256 = vld [vmem:[%s2 + $0x8] sm:$0xff]
        %v257 = vld [vmem:[%s2 + $0x10] sm:$0xff]
        %v258 = vld [vmem:[%s2 + $0x18] sm:$0xff]
        %v259 = vld [vmem:[%s2 + $0x20] sm:$0xff]
        %v260 = vld [vmem:[%s2 + $0x28] sm:$0xff]
        %v261 = vld [vmem:[%s2 + $0x30] sm:$0xff]
        %v262 = vld [vmem:[%s2 + $0x38] sm:$0xff]
        %v263 = vld [vmem:[%s2 + $0x40] sm:$0xff]
        %v264 = vld [vmem:[%s2 + $0x48] sm:$0xff]
        %v265 = vld [vmem:[%s2 + $0x50] sm:$0xff]
        %v266 = vld [vmem:[%s2 + $0x58] sm:$0xff]
        %vm267 = vcmask 261120
        %v269 = vsel %vm267, %v255, 0
        %v272 = vsel %vm267, %v256, 0
        %v275 = vsel %vm267, %v257, 0
        %v278 = vsel %vm267, %v258, 0
        %v281 = vsel %vm267, %v259, 0
        %v284 = vsel %vm267, %v260, 0
        %v287 = vsel %vm267, %v261, 0
        %v290 = vsel %vm267, %v262, 0
        %v293 = vsel %vm267, %v263, 0
        %v296 = vsel %vm267, %v264, 0
        %v299 = vsel %vm267, %v265, 0
        %v302 = vsel %vm267, %v266, 0
        %v305 = vsel %vm267, %v254, 0
        %307 = vmatprep.subr.mxu0 0.0
        %308 = vmatpush1.xpose.msra.mxu0 0.0
        %309 = vmatprep.subr.mxu0 0.0
        %310 = vmatpush1.xpose.msra.mxu0 0.0
        %311 = vmatprep.subr.mxu0 0.0
        %312 = vmatpush1.xpose.msra.mxu0 0.0
        %313 = vmatprep.subr.mxu0 0.0
        %314 = vmatpush1.xpose.msra.mxu0 0.0
        %315 = vmatprep.subr.mxu0 0.0
        %316 = vmatpush1.xpose.msra.mxu0 0.0
        %317 = vmatprep.subr.mxu0 0.0
        %318 = vmatpush1.xpose.msra.mxu0 0.0
        %319 = vmatprep.subr.mxu0 0.0
        %320 = vmatpush1.xpose.msra.mxu0 0.0
        %321 = vmatprep.subr.mxu0 0.0
        %322 = vmatpush1.xpose.msra.mxu0 0.0
        %323 = vmatprep.subr.mxu0 0.0
        %324 = vmatpush1.xpose.msra.mxu0 0.0
        %325 = vmatprep.subr.mxu0 0.0
        %326 = vmatpush1.xpose.msra.mxu0 0.0
        %327 = vmatprep.subr.mxu0 0.0
        %328 = vmatpush1.xpose.msra.mxu0 0.0
        %329 = vmatprep.subr.mxu0 0.0
        %330 = vmatpush1.xpose.msra.mxu0 0.0
        %331 = vmatprep.subr.mxu0 0.0
        %332 = vmatpush1.xpose.msra.mxu0 0.0
        %333 = vmatprep.subr.mxu0 0.0
        %334 = vmatpush1.xpose.msra.mxu0 0.0
        %335 = vmatprep.subr.mxu0 0.0
        %336 = vmatpush1.xpose.msra.mxu0 0.0
        %337 = vmatprep.subr.mxu0 0.0
        %338 = vmatpush1.xpose.msra.mxu0 %v305
        %339 = vmatprep.subr.mxu0 0.0
        %340 = vmatpush2.xpose.msra.mxu0 0.0
        %341 = vmatprep.subr.mxu0 0.0
        %342 = vmatpush2.xpose.msra.mxu0 0.0
        %343 = vmatprep.subr.mxu0 0.0
        %344 = vmatpush2.xpose.msra.mxu0 0.0
        %345 = vmatprep.subr.mxu0 0.0
        %346 = vmatpush2.xpose.msra.mxu0 0.0
        %347 = vmatprep.subr.mxu0 0.0
        %348 = vmatpush2.xpose.msra.mxu0 0.0
        %349 = vmatprep.subr.mxu0 0.0
        %350 = vmatpush2.xpose.msra.mxu0 0.0
        %351 = vmatprep.subr.mxu0 0.0
        %352 = vmatpush2.xpose.msra.mxu0 0.0
        %353 = vmatprep.subr.mxu0 0.0
        %354 = vmatpush2.xpose.msra.mxu0 0.0
        %355 = vmatprep.subr.mxu0 0.0
        %356 = vmatpush2.xpose.msra.mxu0 0.0
        %357 = vmatprep.subr.mxu0 0.0
        %358 = vmatpush2.xpose.msra.mxu0 0.0
        %359 = vmatprep.subr.mxu0 0.0
        %360 = vmatpush2.xpose.msra.mxu0 0.0
        %361 = vmatprep.subr.mxu0 0.0
        %362 = vmatpush2.xpose.msra.mxu0 0.0
        %363 = vmatprep.subr.mxu0 0.0
        %364 = vmatpush2.xpose.msra.mxu0 0.0
        %365 = vmatprep.subr.mxu0 0.0
        %366 = vmatpush2.xpose.msra.mxu0 0.0
        %367 = vmatprep.subr.mxu0 0.0
        %368 = vmatpush2.xpose.msra.mxu0 0.0
        %369 = vmatprep.subr.mxu0 0.0
        %370 = vmatpush2.xpose.msra.mxu0 0.0
        %371 = vmatprep.mubr.f32.mxu0 0.0
        %372 = vmatmul.mubr.f32.gmra.mxu0 %v269
        %v373 = vpop.f32.mrf.mxu0
        %v374 = vadd.f32 0.0, %v373
        %v375 = vpop.f32.mrf.mxu0
        %376 = vmatprep.mubr.f32.mxu0 0.0
        %377 = vmatmul.mubr.f32.gmra.mxu0 %v272
        %v378 = vpop.f32.mrf.mxu0
        %v379 = vadd.f32 0.0, %v378
        %v380 = vpop.f32.mrf.mxu0
        %381 = vmatprep.mubr.f32.mxu0 0.0
        %382 = vmatmul.mubr.f32.gmra.mxu0 %v275
        %v383 = vpop.f32.mrf.mxu0
        %v384 = vadd.f32 0.0, %v383
        %v385 = vpop.f32.mrf.mxu0
        %386 = vmatprep.mubr.f32.mxu0 0.0
        %387 = vmatmul.mubr.f32.gmra.mxu0 %v278
        %v388 = vpop.f32.mrf.mxu0
        %v389 = vadd.f32 0.0, %v388
        %v390 = vpop.f32.mrf.mxu0
        %391 = vmatprep.mubr.f32.mxu0 0.0
        %392 = vmatmul.mubr.f32.gmra.mxu0 %v281
        %v393 = vpop.f32.mrf.mxu0
        %v394 = vadd.f32 0.0, %v393
        %v395 = vpop.f32.mrf.mxu0
        %396 = vmatprep.mubr.f32.mxu0 0.0
        %397 = vmatmul.mubr.f32.gmra.mxu0 %v284
        %v398 = vpop.f32.mrf.mxu0
        %v399 = vadd.f32 0.0, %v398
        %v400 = vpop.f32.mrf.mxu0
        %401 = vmatprep.mubr.f32.mxu0 0.0
        %402 = vmatmul.mubr.f32.gmra.mxu0 %v287
        %v403 = vpop.f32.mrf.mxu0
        %v404 = vadd.f32 0.0, %v403
        %v405 = vpop.f32.mrf.mxu0
        %406 = vmatprep.mubr.f32.mxu0 0.0
        %407 = vmatmul.mubr.f32.gmra.mxu0 %v290
        %v408 = vpop.f32.mrf.mxu0
        %v409 = vadd.f32 0.0, %v408
        %v410 = vpop.f32.mrf.mxu0
        %411 = vmatprep.mubr.f32.mxu0 0.0
        %412 = vmatmul.mubr.f32.gmra.mxu0 %v293
        %v413 = vpop.f32.mrf.mxu0
        %v414 = vadd.f32 0.0, %v413
        %v415 = vpop.f32.mrf.mxu0
        %416 = vmatprep.mubr.f32.mxu0 0.0
        %417 = vmatmul.mubr.f32.gmra.mxu0 %v296
        %v418 = vpop.f32.mrf.mxu0
        %v419 = vadd.f32 0.0, %v418
        %v420 = vpop.f32.mrf.mxu0
        %421 = vmatprep.mubr.f32.mxu0 0.0
        %422 = vmatmul.mubr.f32.gmra.mxu0 %v299
        %v423 = vpop.f32.mrf.mxu0
        %v424 = vadd.f32 0.0, %v423
        %v425 = vpop.f32.mrf.mxu0
        %426 = vmatprep.mubr.f32.mxu0 0.0
        %427 = vmatmul.mubr.f32.gmra.mxu0 %v302
        %v428 = vpop.f32.mrf.mxu0
        %v429 = vadd.f32 0.0, %v428
        %v430 = vpop.f32.mrf.mxu0
        %431 = vdwg.mxu0
        %s432 = sld [smem:[#allocation3 + %s27]]
        %v433 = vlaneseq
        %v434 = vand.u32 %v433, 127
        %v435 = vstv %s432
        %vm436 = vcmp.ge.s32.totalorder %v434, %v435
        %v437 = vsel %vm436, -1000000.0, 0.0
        %v438 = vld [vmem:[%s3] sm:$0xff]
        %v439 = vld [vmem:[%s3 + $0x8] sm:$0xff]
        %v440 = vld [vmem:[%s3 + $0x10] sm:$0xff]
        %v441 = vld [vmem:[%s3 + $0x18] sm:$0xff]
        %442 = vxpose.xlu0.b32.start [1/16] %v374, 128
        %443 = vxpose.xlu0.b32.cont [2/16] 0.0, 128
        %444 = vxpose.xlu0.b32.cont [3/16] 0.0, 128
        %445 = vxpose.xlu0.b32.cont [4/16] 0.0, 128
        %446 = vxpose.xlu0.b32.cont [5/16] 0.0, 128
        %447 = vxpose.xlu0.b32.cont [6/16] 0.0, 128
        %448 = vxpose.xlu0.b32.cont [7/16] 0.0, 128
        %449 = vxpose.xlu0.b32.cont [8/16] 0.0, 128
        %450 = vxpose.xlu0.b32.cont [9/16] 0.0, 128
        %451 = vxpose.xlu0.b32.cont [10/16] 0.0, 128
        %452 = vxpose.xlu0.b32.cont [11/16] 0.0, 128
        %453 = vxpose.xlu0.b32.cont [12/16] 0.0, 128
        %454 = vxpose.xlu0.b32.cont [13/16] 0.0, 128
        %455 = vxpose.xlu0.b32.cont [14/16] 0.0, 128
        %456 = vxpose.xlu0.b32.cont [15/16] 0.0, 128
        %457 = vxpose.xlu0.b32.end [16/16] 0.0, 128
        %v458 = vpop.trf.xlu0
        %v459 = vpop.trf.xlu0
        %v460 = vpop.trf.xlu0
        %v461 = vpop.trf.xlu0
        %v462 = vpop.trf.xlu0
        %v463 = vpop.trf.xlu0
        %v464 = vpop.trf.xlu0
        %v465 = vpop.trf.xlu0
        %v466 = vpop.trf.xlu0
        %v467 = vpop.trf.xlu0
        %v468 = vpop.trf.xlu0
        %v469 = vpop.trf.xlu0
        %v470 = vpop.trf.xlu0
        %v471 = vpop.trf.xlu0
        %v472 = vpop.trf.xlu0
        %v473 = vpop.trf.xlu0
        %vm474 = vcmask 64512
        %v476 = vsel %vm474, %v458, 0
        %478 = vmatprep.subr.mxu0 0.0
        %479 = vmatpush1.msra.mxu0 0.0
        %480 = vmatprep.subr.mxu0 0.0
        %481 = vmatpush1.msra.mxu0 0.0
        %482 = vmatprep.subr.mxu0 0.0
        %483 = vmatpush1.msra.mxu0 0.0
        %484 = vmatprep.subr.mxu0 0.0
        %485 = vmatpush1.msra.mxu0 0.0
        %486 = vmatprep.subr.mxu0 0.0
        %487 = vmatpush1.msra.mxu0 0.0
        %488 = vmatprep.subr.mxu0 0.0
        %489 = vmatpush1.msra.mxu0 0.0
        %490 = vmatprep.subr.mxu0 0.0
        %491 = vmatpush1.msra.mxu0 0.0
        %492 = vmatprep.subr.mxu0 0.0
        %493 = vmatpush1.msra.mxu0 0.0
        %494 = vmatprep.subr.mxu0 0.0
        %495 = vmatpush1.msra.mxu0 0.0
        %496 = vmatprep.subr.mxu0 0.0
        %497 = vmatpush1.msra.mxu0 0.0
        %498 = vmatprep.subr.mxu0 0.0
        %499 = vmatpush1.msra.mxu0 0.0
        %500 = vmatprep.subr.mxu0 0.0
        %501 = vmatpush1.msra.mxu0 0.0
        %502 = vmatprep.subr.mxu0 0.0
        %503 = vmatpush1.msra.mxu0 0.0
        %504 = vmatprep.subr.mxu0 0.0
        %505 = vmatpush1.msra.mxu0 0.0
        %506 = vmatprep.subr.mxu0 0.0
        %507 = vmatpush1.msra.mxu0 0.0
        %508 = vmatprep.subr.mxu0 0.0
        %509 = vmatpush1.msra.mxu0 %v394
        %510 = vmatprep.subr.mxu0 0.0
        %511 = vmatpush2.msra.mxu0 0.0
        %512 = vmatprep.subr.mxu0 0.0
        %513 = vmatpush2.msra.mxu0 0.0
        %514 = vmatprep.subr.mxu0 0.0
        %515 = vmatpush2.msra.mxu0 0.0
        %516 = vmatprep.subr.mxu0 0.0
        %517 = vmatpush2.msra.mxu0 0.0
        %518 = vmatprep.subr.mxu0 0.0
        %519 = vmatpush2.msra.mxu0 0.0
        %520 = vmatprep.subr.mxu0 0.0
        %521 = vmatpush2.msra.mxu0 0.0
        %522 = vmatprep.subr.mxu0 0.0
        %523 = vmatpush2.msra.mxu0 0.0
        %524 = vmatprep.subr.mxu0 0.0
        %525 = vmatpush2.msra.mxu0 0.0
        %526 = vmatprep.subr.mxu0 0.0
        %527 = vmatpush2.msra.mxu0 0.0
        %528 = vmatprep.subr.mxu0 0.0
        %529 = vmatpush2.msra.mxu0 0.0
        %530 = vmatprep.subr.mxu0 0.0
        %531 = vmatpush2.msra.mxu0 0.0
        %532 = vmatprep.subr.mxu0 0.0
        %533 = vmatpush2.msra.mxu0 0.0
        %534 = vmatprep.subr.mxu0 0.0
        %535 = vmatpush2.msra.mxu0 0.0
        %536 = vmatprep.subr.mxu0 0.0
        %537 = vmatpush2.msra.mxu0 0.0
        %538 = vmatprep.subr.mxu0 0.0
        %539 = vmatpush2.msra.mxu0 0.0
        %540 = vmatprep.subr.mxu0 0.0
        %541 = vmatpush2.msra.mxu0 0.0
        %542 = vmatprep.mubr.f32.mxu0 0.0
        %543 = vmatmul.mubr.f32.gmra.mxu0 %v476
        %v544 = vpop.f32.mrf.mxu0
        %v545 = vadd.f32 %v437, %v544
        %v546 = vpop.f32.mrf.mxu0
        %547 = vdwg.mxu0
        %v548 = vsel %vm474, %v545, -inf
        %549 = vmax.xlane.f32.xlu0 %v548
        %v550 = vpop.xlane.xlu0 %549
        %v551 = vsub.f32 %v545, %v550
        %v552 = vmul.f32 %v551, 1.442695
        %v553 = vpow.pop %v552
        %v554 = vsel %vm474, %v553, 0.0
        %555 = vadd.xlane.f32.xlu0 %v554
        %v556 = vpop.xlane.xlu0 %555
        %v557 = vrcp.pop %v556
        %v558 = vmul.f32 %v553, %v557
        %v560 = vsel %vm474, %v558, 0
        %v563 = vsel %vm474, %v414, 0
        %565 = vmatprep.subr.mxu0 0.0
        %566 = vmatpush1.xpose.msra.mxu0 0.0
        %567 = vmatprep.subr.mxu0 0.0
        %568 = vmatpush1.xpose.msra.mxu0 0.0
        %569 = vmatprep.subr.mxu0 0.0
        %570 = vmatpush1.xpose.msra.mxu0 0.0
        %571 = vmatprep.subr.mxu0 0.0
        %572 = vmatpush1.xpose.msra.mxu0 0.0
        %573 = vmatprep.subr.mxu0 0.0
        %574 = vmatpush1.xpose.msra.mxu0 0.0
        %575 = vmatprep.subr.mxu0 0.0
        %576 = vmatpush1.xpose.msra.mxu0 0.0
        %577 = vmatprep.subr.mxu0 0.0
        %578 = vmatpush1.xpose.msra.mxu0 0.0
        %579 = vmatprep.subr.mxu0 0.0
        %580 = vmatpush1.xpose.msra.mxu0 0.0
        %581 = vmatprep.subr.mxu0 0.0
        %582 = vmatpush1.xpose.msra.mxu0 0.0
        %583 = vmatprep.subr.mxu0 0.0
        %584 = vmatpush1.xpose.msra.mxu0 0.0
        %585 = vmatprep.subr.mxu0 0.0
        %586 = vmatpush1.xpose.msra.mxu0 0.0
        %587 = vmatprep.subr.mxu0 0.0
        %588 = vmatpush1.xpose.msra.mxu0 0.0
        %589 = vmatprep.subr.mxu0 0.0
        %590 = vmatpush1.xpose.msra.mxu0 0.0
        %591 = vmatprep.subr.mxu0 0.0
        %592 = vmatpush1.xpose.msra.mxu0 0.0
        %593 = vmatprep.subr.mxu0 0.0
        %594 = vmatpush1.xpose.msra.mxu0 0.0
        %595 = vmatprep.subr.mxu0 0.0
        %596 = vmatpush1.xpose.msra.mxu0 %v563
        %597 = vmatprep.subr.mxu0 0.0
        %598 = vmatpush2.xpose.msra.mxu0 0.0
        %599 = vmatprep.subr.mxu0 0.0
        %600 = vmatpush2.xpose.msra.mxu0 0.0
        %601 = vmatprep.subr.mxu0 0.0
        %602 = vmatpush2.xpose.msra.mxu0 0.0
        %603 = vmatprep.subr.mxu0 0.0
        %604 = vmatpush2.xpose.msra.mxu0 0.0
        %605 = vmatprep.subr.mxu0 0.0
        %606 = vmatpush2.xpose.msra.mxu0 0.0
        %607 = vmatprep.subr.mxu0 0.0
        %608 = vmatpush2.xpose.msra.mxu0 0.0
        %609 = vmatprep.subr.mxu0 0.0
        %610 = vmatpush2.xpose.msra.mxu0 0.0
        %611 = vmatprep.subr.mxu0 0.0
        %612 = vmatpush2.xpose.msra.mxu0 0.0
        %613 = vmatprep.subr.mxu0 0.0
        %614 = vmatpush2.xpose.msra.mxu0 0.0
        %615 = vmatprep.subr.mxu0 0.0
        %616 = vmatpush2.xpose.msra.mxu0 0.0
        %617 = vmatprep.subr.mxu0 0.0
        %618 = vmatpush2.xpose.msra.mxu0 0.0
        %619 = vmatprep.subr.mxu0 0.0
        %620 = vmatpush2.xpose.msra.mxu0 0.0
        %621 = vmatprep.subr.mxu0 0.0
        %622 = vmatpush2.xpose.msra.mxu0 0.0
        %623 = vmatprep.subr.mxu0 0.0
        %624 = vmatpush2.xpose.msra.mxu0 0.0
        %625 = vmatprep.subr.mxu0 0.0
        %626 = vmatpush2.xpose.msra.mxu0 0.0
        %627 = vmatprep.subr.mxu0 0.0
        %628 = vmatpush2.xpose.msra.mxu0 0.0
        %629 = vmatprep.mubr.f32.mxu0 0.0
        %630 = vmatmul.mubr.f32.gmra.mxu0 %v560
        %v631 = vpop.f32.mrf.mxu0
        %v632 = vadd.f32 0.0, %v631
        %v633 = vpop.f32.mrf.mxu0
        %634 = vdwg.mxu0
        %635 = vxpose.xlu0.b32.start [1/16] %v379, 128
        %636 = vxpose.xlu0.b32.cont [2/16] 0.0, 128
        %637 = vxpose.xlu0.b32.cont [3/16] 0.0, 128
        %638 = vxpose.xlu0.b32.cont [4/16] 0.0, 128
        %639 = vxpose.xlu0.b32.cont [5/16] 0.0, 128
        %640 = vxpose.xlu0.b32.cont [6/16] 0.0, 128
        %641 = vxpose.xlu0.b32.cont [7/16] 0.0, 128
        %642 = vxpose.xlu0.b32.cont [8/16] 0.0, 128
        %643 = vxpose.xlu0.b32.cont [9/16] 0.0, 128
        %644 = vxpose.xlu0.b32.cont [10/16] 0.0, 128
        %645 = vxpose.xlu0.b32.cont [11/16] 0.0, 128
        %646 = vxpose.xlu0.b32.cont [12/16] 0.0, 128
        %647 = vxpose.xlu0.b32.cont [13/16] 0.0, 128
        %648 = vxpose.xlu0.b32.cont [14/16] 0.0, 128
        %649 = vxpose.xlu0.b32.cont [15/16] 0.0, 128
        %650 = vxpose.xlu0.b32.end [16/16] 0.0, 128
        %v651 = vpop.trf.xlu0
        %v652 = vpop.trf.xlu0
        %v653 = vpop.trf.xlu0
        %v654 = vpop.trf.xlu0
        %v655 = vpop.trf.xlu0
        %v656 = vpop.trf.xlu0
        %v657 = vpop.trf.xlu0
        %v658 = vpop.trf.xlu0
        %v659 = vpop.trf.xlu0
        %v660 = vpop.trf.xlu0
        %v661 = vpop.trf.xlu0
        %v662 = vpop.trf.xlu0
        %v663 = vpop.trf.xlu0
        %v664 = vpop.trf.xlu0
        %v665 = vpop.trf.xlu0
        %v666 = vpop.trf.xlu0
        %v668 = vsel %vm474, %v651, 0
        %670 = vmatprep.subr.mxu0 0.0
        %671 = vmatpush1.msra.mxu0 0.0
        %672 = vmatprep.subr.mxu0 0.0
        %673 = vmatpush1.msra.mxu0 0.0
        %674 = vmatprep.subr.mxu0 0.0
        %675 = vmatpush1.msra.mxu0 0.0
        %676 = vmatprep.subr.mxu0 0.0
        %677 = vmatpush1.msra.mxu0 0.0
        %678 = vmatprep.subr.mxu0 0.0
        %679 = vmatpush1.msra.mxu0 0.0
        %680 = vmatprep.subr.mxu0 0.0
        %681 = vmatpush1.msra.mxu0 0.0
        %682 = vmatprep.subr.mxu0 0.0
        %683 = vmatpush1.msra.mxu0 0.0
        %684 = vmatprep.subr.mxu0 0.0
        %685 = vmatpush1.msra.mxu0 0.0
        %686 = vmatprep.subr.mxu0 0.0
        %687 = vmatpush1.msra.mxu0 0.0
        %688 = vmatprep.subr.mxu0 0.0
        %689 = vmatpush1.msra.mxu0 0.0
        %690 = vmatprep.subr.mxu0 0.0
        %691 = vmatpush1.msra.mxu0 0.0
        %692 = vmatprep.subr.mxu0 0.0
        %693 = vmatpush1.msra.mxu0 0.0
        %694 = vmatprep.subr.mxu0 0.0
        %695 = vmatpush1.msra.mxu0 0.0
        %696 = vmatprep.subr.mxu0 0.0
        %697 = vmatpush1.msra.mxu0 0.0
        %698 = vmatprep.subr.mxu0 0.0
        %699 = vmatpush1.msra.mxu0 0.0
        %700 = vmatprep.subr.mxu0 0.0
        %701 = vmatpush1.msra.mxu0 %v399
        %702 = vmatprep.subr.mxu0 0.0
        %703 = vmatpush2.msra.mxu0 0.0
        %704 = vmatprep.subr.mxu0 0.0
        %705 = vmatpush2.msra.mxu0 0.0
        %706 = vmatprep.subr.mxu0 0.0
        %707 = vmatpush2.msra.mxu0 0.0
        %708 = vmatprep.subr.mxu0 0.0
        %709 = vmatpush2.msra.mxu0 0.0
        %710 = vmatprep.subr.mxu0 0.0
        %711 = vmatpush2.msra.mxu0 0.0
        %712 = vmatprep.subr.mxu0 0.0
        %713 = vmatpush2.msra.mxu0 0.0
        %714 = vmatprep.subr.mxu0 0.0
        %715 = vmatpush2.msra.mxu0 0.0
        %716 = vmatprep.subr.mxu0 0.0
        %717 = vmatpush2.msra.mxu0 0.0
        %718 = vmatprep.subr.mxu0 0.0
        %719 = vmatpush2.msra.mxu0 0.0
        %720 = vmatprep.subr.mxu0 0.0
        %721 = vmatpush2.msra.mxu0 0.0
        %722 = vmatprep.subr.mxu0 0.0
        %723 = vmatpush2.msra.mxu0 0.0
        %724 = vmatprep.subr.mxu0 0.0
        %725 = vmatpush2.msra.mxu0 0.0
        %726 = vmatprep.subr.mxu0 0.0
        %727 = vmatpush2.msra.mxu0 0.0
        %728 = vmatprep.subr.mxu0 0.0
        %729 = vmatpush2.msra.mxu0 0.0
        %730 = vmatprep.subr.mxu0 0.0
        %731 = vmatpush2.msra.mxu0 0.0
        %732 = vmatprep.subr.mxu0 0.0
        %733 = vmatpush2.msra.mxu0 0.0
        %734 = vmatprep.mubr.f32.mxu0 0.0
        %735 = vmatmul.mubr.f32.gmra.mxu0 %v668
        %v736 = vpop.f32.mrf.mxu0
        %v737 = vadd.f32 %v437, %v736
        %v738 = vpop.f32.mrf.mxu0
        %739 = vdwg.mxu0
        %v740 = vsel %vm474, %v737, -inf
        %741 = vmax.xlane.f32.xlu0 %v740
        %v742 = vpop.xlane.xlu0 %741
        %v743 = vsub.f32 %v737, %v742
        %v744 = vmul.f32 %v743, 1.442695
        %v745 = vpow.pop %v744
        %v746 = vsel %vm474, %v745, 0.0
        %747 = vadd.xlane.f32.xlu0 %v746
        %v748 = vpop.xlane.xlu0 %747
        %v749 = vrcp.pop %v748
        %v750 = vmul.f32 %v745, %v749
        %v752 = vsel %vm474, %v750, 0
        %v755 = vsel %vm474, %v419, 0
        %757 = vmatprep.subr.mxu0 0.0
        %758 = vmatpush1.xpose.msra.mxu0 0.0
        %759 = vmatprep.subr.mxu0 0.0
        %760 = vmatpush1.xpose.msra.mxu0 0.0
        %761 = vmatprep.subr.mxu0 0.0
        %762 = vmatpush1.xpose.msra.mxu0 0.0
        %763 = vmatprep.subr.mxu0 0.0
        %764 = vmatpush1.xpose.msra.mxu0 0.0
        %765 = vmatprep.subr.mxu0 0.0
        %766 = vmatpush1.xpose.msra.mxu0 0.0
        %767 = vmatprep.subr.mxu0 0.0
        %768 = vmatpush1.xpose.msra.mxu0 0.0
        %769 = vmatprep.subr.mxu0 0.0
        %770 = vmatpush1.xpose.msra.mxu0 0.0
        %771 = vmatprep.subr.mxu0 0.0
        %772 = vmatpush1.xpose.msra.mxu0 0.0
        %773 = vmatprep.subr.mxu0 0.0
        %774 = vmatpush1.xpose.msra.mxu0 0.0
        %775 = vmatprep.subr.mxu0 0.0
        %776 = vmatpush1.xpose.msra.mxu0 0.0
        %777 = vmatprep.subr.mxu0 0.0
        %778 = vmatpush1.xpose.msra.mxu0 0.0
        %779 = vmatprep.subr.mxu0 0.0
        %780 = vmatpush1.xpose.msra.mxu0 0.0
        %781 = vmatprep.subr.mxu0 0.0
        %782 = vmatpush1.xpose.msra.mxu0 0.0
        %783 = vmatprep.subr.mxu0 0.0
        %784 = vmatpush1.xpose.msra.mxu0 0.0
        %785 = vmatprep.subr.mxu0 0.0
        %786 = vmatpush1.xpose.msra.mxu0 0.0
        %787 = vmatprep.subr.mxu0 0.0
        %788 = vmatpush1.xpose.msra.mxu0 %v755
        %789 = vmatprep.subr.mxu0 0.0
        %790 = vmatpush2.xpose.msra.mxu0 0.0
        %791 = vmatprep.subr.mxu0 0.0
        %792 = vmatpush2.xpose.msra.mxu0 0.0
        %793 = vmatprep.subr.mxu0 0.0
        %794 = vmatpush2.xpose.msra.mxu0 0.0
        %795 = vmatprep.subr.mxu0 0.0
        %796 = vmatpush2.xpose.msra.mxu0 0.0
        %797 = vmatprep.subr.mxu0 0.0
        %798 = vmatpush2.xpose.msra.mxu0 0.0
        %799 = vmatprep.subr.mxu0 0.0
        %800 = vmatpush2.xpose.msra.mxu0 0.0
        %801 = vmatprep.subr.mxu0 0.0
        %802 = vmatpush2.xpose.msra.mxu0 0.0
        %803 = vmatprep.subr.mxu0 0.0
        %804 = vmatpush2.xpose.msra.mxu0 0.0
        %805 = vmatprep.subr.mxu0 0.0
        %806 = vmatpush2.xpose.msra.mxu0 0.0
        %807 = vmatprep.subr.mxu0 0.0
        %808 = vmatpush2.xpose.msra.mxu0 0.0
        %809 = vmatprep.subr.mxu0 0.0
        %810 = vmatpush2.xpose.msra.mxu0 0.0
        %811 = vmatprep.subr.mxu0 0.0
        %812 = vmatpush2.xpose.msra.mxu0 0.0
        %813 = vmatprep.subr.mxu0 0.0
        %814 = vmatpush2.xpose.msra.mxu0 0.0
        %815 = vmatprep.subr.mxu0 0.0
        %816 = vmatpush2.xpose.msra.mxu0 0.0
        %817 = vmatprep.subr.mxu0 0.0
        %818 = vmatpush2.xpose.msra.mxu0 0.0
        %819 = vmatprep.subr.mxu0 0.0
        %820 = vmatpush2.xpose.msra.mxu0 0.0
        %821 = vmatprep.mubr.f32.mxu0 0.0
        %822 = vmatmul.mubr.f32.gmra.mxu0 %v752
        %v823 = vpop.f32.mrf.mxu0
        %v824 = vadd.f32 0.0, %v823
        %v825 = vpop.f32.mrf.mxu0
        %826 = vdwg.mxu0
        %v828 = vsel %vm474, %v824, 0
        %830 = vmatprep.subr.mxu0 0.0
        %831 = vmatpush1.msra.mxu0 0.0
        %832 = vmatprep.subr.mxu0 0.0
        %833 = vmatpush1.msra.mxu0 0.0
        %834 = vmatprep.subr.mxu0 0.0
        %835 = vmatpush1.msra.mxu0 0.0
        %836 = vmatprep.subr.mxu0 0.0
        %837 = vmatpush1.msra.mxu0 0.0
        %838 = vmatprep.subr.mxu0 0.0
        %839 = vmatpush1.msra.mxu0 0.0
        %840 = vmatprep.subr.mxu0 0.0
        %841 = vmatpush1.msra.mxu0 0.0
        %842 = vmatprep.subr.mxu0 0.0
        %843 = vmatpush1.msra.mxu0 0.0
        %844 = vmatprep.subr.mxu0 0.0
        %845 = vmatpush1.msra.mxu0 0.0
        %846 = vmatprep.subr.mxu0 0.0
        %847 = vmatpush1.msra.mxu0 0.0
        %848 = vmatprep.subr.mxu0 0.0
        %849 = vmatpush1.msra.mxu0 0.0
        %850 = vmatprep.subr.mxu0 0.0
        %851 = vmatpush1.msra.mxu0 0.0
        %852 = vmatprep.subr.mxu0 0.0
        %853 = vmatpush1.msra.mxu0 0.0
        %854 = vmatprep.subr.mxu0 0.0
        %855 = vmatpush1.msra.mxu0 0.0
        %856 = vmatprep.subr.mxu0 0.0
        %857 = vmatpush1.msra.mxu0 0.0
        %858 = vmatprep.subr.mxu0 0.0
        %859 = vmatpush1.msra.mxu0 0.0
        %860 = vmatprep.subr.mxu0 0.0
        %861 = vmatpush1.msra.mxu0 %v439
        %862 = vmatprep.subr.mxu0 0.0
        %863 = vmatpush2.msra.mxu0 0.0
        %864 = vmatprep.subr.mxu0 0.0
        %865 = vmatpush2.msra.mxu0 0.0
        %866 = vmatprep.subr.mxu0 0.0
        %867 = vmatpush2.msra.mxu0 0.0
        %868 = vmatprep.subr.mxu0 0.0
        %869 = vmatpush2.msra.mxu0 0.0
        %870 = vmatprep.subr.mxu0 0.0
        %871 = vmatpush2.msra.mxu0 0.0
        %872 = vmatprep.subr.mxu0 0.0
        %873 = vmatpush2.msra.mxu0 0.0
        %874 = vmatprep.subr.mxu0 0.0
        %875 = vmatpush2.msra.mxu0 0.0
        %876 = vmatprep.subr.mxu0 0.0
        %877 = vmatpush2.msra.mxu0 0.0
        %878 = vmatprep.subr.mxu0 0.0
        %879 = vmatpush2.msra.mxu0 0.0
        %880 = vmatprep.subr.mxu0 0.0
        %881 = vmatpush2.msra.mxu0 0.0
        %882 = vmatprep.subr.mxu0 0.0
        %883 = vmatpush2.msra.mxu0 0.0
        %884 = vmatprep.subr.mxu0 0.0
        %885 = vmatpush2.msra.mxu0 0.0
        %886 = vmatprep.subr.mxu0 0.0
        %887 = vmatpush2.msra.mxu0 0.0
        %888 = vmatprep.subr.mxu0 0.0
        %889 = vmatpush2.msra.mxu0 0.0
        %890 = vmatprep.subr.mxu0 0.0
        %891 = vmatpush2.msra.mxu0 0.0
        %892 = vmatprep.subr.mxu0 0.0
        %893 = vmatpush2.msra.mxu0 0.0
        %894 = vmatprep.mubr.f32.mxu0 0.0
        %895 = vmatmul.mubr.f32.gmra.mxu0 %v828
        %v896 = vpop.f32.mrf.mxu0
        %v897 = vadd.f32 0.0, %v896
        %v898 = vpop.f32.mrf.mxu0
        %899 = vdwg.mxu0
        %v901 = vsel %vm474, %v632, 0
        %903 = vmatprep.subr.mxu0 0.0
        %904 = vmatpush1.msra.mxu0 0.0
        %905 = vmatprep.subr.mxu0 0.0
        %906 = vmatpush1.msra.mxu0 0.0
        %907 = vmatprep.subr.mxu0 0.0
        %908 = vmatpush1.msra.mxu0 0.0
        %909 = vmatprep.subr.mxu0 0.0
        %910 = vmatpush1.msra.mxu0 0.0
        %911 = vmatprep.subr.mxu0 0.0
        %912 = vmatpush1.msra.mxu0 0.0
        %913 = vmatprep.subr.mxu0 0.0
        %914 = vmatpush1.msra.mxu0 0.0
        %915 = vmatprep.subr.mxu0 0.0
        %916 = vmatpush1.msra.mxu0 0.0
        %917 = vmatprep.subr.mxu0 0.0
        %918 = vmatpush1.msra.mxu0 0.0
        %919 = vmatprep.subr.mxu0 0.0
        %920 = vmatpush1.msra.mxu0 0.0
        %921 = vmatprep.subr.mxu0 0.0
        %922 = vmatpush1.msra.mxu0 0.0
        %923 = vmatprep.subr.mxu0 0.0
        %924 = vmatpush1.msra.mxu0 0.0
        %925 = vmatprep.subr.mxu0 0.0
        %926 = vmatpush1.msra.mxu0 0.0
        %927 = vmatprep.subr.mxu0 0.0
        %928 = vmatpush1.msra.mxu0 0.0
        %929 = vmatprep.subr.mxu0 0.0
        %930 = vmatpush1.msra.mxu0 0.0
        %931 = vmatprep.subr.mxu0 0.0
        %932 = vmatpush1.msra.mxu0 0.0
        %933 = vmatprep.subr.mxu0 0.0
        %934 = vmatpush1.msra.mxu0 %v438
        %935 = vmatprep.subr.mxu0 0.0
        %936 = vmatpush2.msra.mxu0 0.0
        %937 = vmatprep.subr.mxu0 0.0
        %938 = vmatpush2.msra.mxu0 0.0
        %939 = vmatprep.subr.mxu0 0.0
        %940 = vmatpush2.msra.mxu0 0.0
        %941 = vmatprep.subr.mxu0 0.0
        %942 = vmatpush2.msra.mxu0 0.0
        %943 = vmatprep.subr.mxu0 0.0
        %944 = vmatpush2.msra.mxu0 0.0
        %945 = vmatprep.subr.mxu0 0.0
        %946 = vmatpush2.msra.mxu0 0.0
        %947 = vmatprep.subr.mxu0 0.0
        %948 = vmatpush2.msra.mxu0 0.0
        %949 = vmatprep.subr.mxu0 0.0
        %950 = vmatpush2.msra.mxu0 0.0
        %951 = vmatprep.subr.mxu0 0.0
        %952 = vmatpush2.msra.mxu0 0.0
        %953 = vmatprep.subr.mxu0 0.0
        %954 = vmatpush2.msra.mxu0 0.0
        %955 = vmatprep.subr.mxu0 0.0
        %956 = vmatpush2.msra.mxu0 0.0
        %957 = vmatprep.subr.mxu0 0.0
        %958 = vmatpush2.msra.mxu0 0.0
        %959 = vmatprep.subr.mxu0 0.0
        %960 = vmatpush2.msra.mxu0 0.0
        %961 = vmatprep.subr.mxu0 0.0
        %962 = vmatpush2.msra.mxu0 0.0
        %963 = vmatprep.subr.mxu0 0.0
        %964 = vmatpush2.msra.mxu0 0.0
        %965 = vmatprep.subr.mxu0 0.0
        %966 = vmatpush2.msra.mxu0 0.0
        %967 = vmatprep.mubr.f32.mxu0 0.0
        %968 = vmatmul.mubr.f32.gmra.mxu0 %v901
        %v969 = vpop.f32.mrf.mxu0
        %v970 = vadd.f32 %v897, %v969
        %v971 = vpop.f32.mrf.mxu0
        %972 = vdwg.mxu0
        %973 = vxpose.xlu0.b32.start [1/16] %v384, 128
        %974 = vxpose.xlu0.b32.cont [2/16] 0.0, 128
        %975 = vxpose.xlu0.b32.cont [3/16] 0.0, 128
        %976 = vxpose.xlu0.b32.cont [4/16] 0.0, 128
        %977 = vxpose.xlu0.b32.cont [5/16] 0.0, 128
        %978 = vxpose.xlu0.b32.cont [6/16] 0.0, 128
        %979 = vxpose.xlu0.b32.cont [7/16] 0.0, 128
        %980 = vxpose.xlu0.b32.cont [8/16] 0.0, 128
        %981 = vxpose.xlu0.b32.cont [9/16] 0.0, 128
        %982 = vxpose.xlu0.b32.cont [10/16] 0.0, 128
        %983 = vxpose.xlu0.b32.cont [11/16] 0.0, 128
        %984 = vxpose.xlu0.b32.cont [12/16] 0.0, 128
        %985 = vxpose.xlu0.b32.cont [13/16] 0.0, 128
        %986 = vxpose.xlu0.b32.cont [14/16] 0.0, 128
        %987 = vxpose.xlu0.b32.cont [15/16] 0.0, 128
        %988 = vxpose.xlu0.b32.end [16/16] 0.0, 128
        %v989 = vpop.trf.xlu0
        %v990 = vpop.trf.xlu0
        %v991 = vpop.trf.xlu0
        %v992 = vpop.trf.xlu0
        %v993 = vpop.trf.xlu0
        %v994 = vpop.trf.xlu0
        %v995 = vpop.trf.xlu0
        %v996 = vpop.trf.xlu0
        %v997 = vpop.trf.xlu0
        %v998 = vpop.trf.xlu0
        %v999 = vpop.trf.xlu0
        %v1000 = vpop.trf.xlu0
        %v1001 = vpop.trf.xlu0
        %v1002 = vpop.trf.xlu0
        %v1003 = vpop.trf.xlu0
        %v1004 = vpop.trf.xlu0
        %v1006 = vsel %vm474, %v989, 0
        %1008 = vmatprep.subr.mxu0 0.0
        %1009 = vmatpush1.msra.mxu0 0.0
        %1010 = vmatprep.subr.mxu0 0.0
        %1011 = vmatpush1.msra.mxu0 0.0
        %1012 = vmatprep.subr.mxu0 0.0
        %1013 = vmatpush1.msra.mxu0 0.0
        %1014 = vmatprep.subr.mxu0 0.0
        %1015 = vmatpush1.msra.mxu0 0.0
        %1016 = vmatprep.subr.mxu0 0.0
        %1017 = vmatpush1.msra.mxu0 0.0
        %1018 = vmatprep.subr.mxu0 0.0
        %1019 = vmatpush1.msra.mxu0 0.0
        %1020 = vmatprep.subr.mxu0 0.0
        %1021 = vmatpush1.msra.mxu0 0.0
        %1022 = vmatprep.subr.mxu0 0.0
        %1023 = vmatpush1.msra.mxu0 0.0
        %1024 = vmatprep.subr.mxu0 0.0
        %1025 = vmatpush1.msra.mxu0 0.0
        %1026 = vmatprep.subr.mxu0 0.0
        %1027 = vmatpush1.msra.mxu0 0.0
        %1028 = vmatprep.subr.mxu0 0.0
        %1029 = vmatpush1.msra.mxu0 0.0
        %1030 = vmatprep.subr.mxu0 0.0
        %1031 = vmatpush1.msra.mxu0 0.0
        %1032 = vmatprep.subr.mxu0 0.0
        %1033 = vmatpush1.msra.mxu0 0.0
        %1034 = vmatprep.subr.mxu0 0.0
        %1035 = vmatpush1.msra.mxu0 0.0
        %1036 = vmatprep.subr.mxu0 0.0
        %1037 = vmatpush1.msra.mxu0 0.0
        %1038 = vmatprep.subr.mxu0 0.0
        %1039 = vmatpush1.msra.mxu0 %v404
        %1040 = vmatprep.subr.mxu0 0.0
        %1041 = vmatpush2.msra.mxu0 0.0
        %1042 = vmatprep.subr.mxu0 0.0
        %1043 = vmatpush2.msra.mxu0 0.0
        %1044 = vmatprep.subr.mxu0 0.0
        %1045 = vmatpush2.msra.mxu0 0.0
        %1046 = vmatprep.subr.mxu0 0.0
        %1047 = vmatpush2.msra.mxu0 0.0
        %1048 = vmatprep.subr.mxu0 0.0
        %1049 = vmatpush2.msra.mxu0 0.0
        %1050 = vmatprep.subr.mxu0 0.0
        %1051 = vmatpush2.msra.mxu0 0.0
        %1052 = vmatprep.subr.mxu0 0.0
        %1053 = vmatpush2.msra.mxu0 0.0
        %1054 = vmatprep.subr.mxu0 0.0
        %1055 = vmatpush2.msra.mxu0 0.0
        %1056 = vmatprep.subr.mxu0 0.0
        %1057 = vmatpush2.msra.mxu0 0.0
        %1058 = vmatprep.subr.mxu0 0.0
        %1059 = vmatpush2.msra.mxu0 0.0
        %1060 = vmatprep.subr.mxu0 0.0
        %1061 = vmatpush2.msra.mxu0 0.0
        %1062 = vmatprep.subr.mxu0 0.0
        %1063 = vmatpush2.msra.mxu0 0.0
        %1064 = vmatprep.subr.mxu0 0.0
        %1065 = vmatpush2.msra.mxu0 0.0
        %1066 = vmatprep.subr.mxu0 0.0
        %1067 = vmatpush2.msra.mxu0 0.0
        %1068 = vmatprep.subr.mxu0 0.0
        %1069 = vmatpush2.msra.mxu0 0.0
        %1070 = vmatprep.subr.mxu0 0.0
        %1071 = vmatpush2.msra.mxu0 0.0
        %1072 = vmatprep.mubr.f32.mxu0 0.0
        %1073 = vmatmul.mubr.f32.gmra.mxu0 %v1006
        %v1074 = vpop.f32.mrf.mxu0
        %v1075 = vadd.f32 %v437, %v1074
        %v1076 = vpop.f32.mrf.mxu0
        %1077 = vdwg.mxu0
        %v1078 = vsel %vm474, %v1075, -inf
        %1079 = vmax.xlane.f32.xlu0 %v1078
        %v1080 = vpop.xlane.xlu0 %1079
        %v1081 = vsub.f32 %v1075, %v1080
        %v1082 = vmul.f32 %v1081, 1.442695
        %v1083 = vpow.pop %v1082
        %v1084 = vsel %vm474, %v1083, 0.0
        %1085 = vadd.xlane.f32.xlu0 %v1084
        %v1086 = vpop.xlane.xlu0 %1085
        %v1087 = vrcp.pop %v1086
        %v1088 = vmul.f32 %v1083, %v1087
        %v1090 = vsel %vm474, %v1088, 0
        %v1093 = vsel %vm474, %v424, 0
        %1095 = vmatprep.subr.mxu0 0.0
        %1096 = vmatpush1.xpose.msra.mxu0 0.0
        %1097 = vmatprep.subr.mxu0 0.0
        %1098 = vmatpush1.xpose.msra.mxu0 0.0
        %1099 = vmatprep.subr.mxu0 0.0
        %1100 = vmatpush1.xpose.msra.mxu0 0.0
        %1101 = vmatprep.subr.mxu0 0.0
        %1102 = vmatpush1.xpose.msra.mxu0 0.0
        %1103 = vmatprep.subr.mxu0 0.0
        %1104 = vmatpush1.xpose.msra.mxu0 0.0
        %1105 = vmatprep.subr.mxu0 0.0
        %1106 = vmatpush1.xpose.msra.mxu0 0.0
        %1107 = vmatprep.subr.mxu0 0.0
        %1108 = vmatpush1.xpose.msra.mxu0 0.0
        %1109 = vmatprep.subr.mxu0 0.0
        %1110 = vmatpush1.xpose.msra.mxu0 0.0
        %1111 = vmatprep.subr.mxu0 0.0
        %1112 = vmatpush1.xpose.msra.mxu0 0.0
        %1113 = vmatprep.subr.mxu0 0.0
        %1114 = vmatpush1.xpose.msra.mxu0 0.0
        %1115 = vmatprep.subr.mxu0 0.0
        %1116 = vmatpush1.xpose.msra.mxu0 0.0
        %1117 = vmatprep.subr.mxu0 0.0
        %1118 = vmatpush1.xpose.msra.mxu0 0.0
        %1119 = vmatprep.subr.mxu0 0.0
        %1120 = vmatpush1.xpose.msra.mxu0 0.0
        %1121 = vmatprep.subr.mxu0 0.0
        %1122 = vmatpush1.xpose.msra.mxu0 0.0
        %1123 = vmatprep.subr.mxu0 0.0
        %1124 = vmatpush1.xpose.msra.mxu0 0.0
        %1125 = vmatprep.subr.mxu0 0.0
        %1126 = vmatpush1.xpose.msra.mxu0 %v1093
        %1127 = vmatprep.subr.mxu0 0.0
        %1128 = vmatpush2.xpose.msra.mxu0 0.0
        %1129 = vmatprep.subr.mxu0 0.0
        %1130 = vmatpush2.xpose.msra.mxu0 0.0
        %1131 = vmatprep.subr.mxu0 0.0
        %1132 = vmatpush2.xpose.msra.mxu0 0.0
        %1133 = vmatprep.subr.mxu0 0.0
        %1134 = vmatpush2.xpose.msra.mxu0 0.0
        %1135 = vmatprep.subr.mxu0 0.0
        %1136 = vmatpush2.xpose.msra.mxu0 0.0
        %1137 = vmatprep.subr.mxu0 0.0
        %1138 = vmatpush2.xpose.msra.mxu0 0.0
        %1139 = vmatprep.subr.mxu0 0.0
        %1140 = vmatpush2.xpose.msra.mxu0 0.0
        %1141 = vmatprep.subr.mxu0 0.0
        %1142 = vmatpush2.xpose.msra.mxu0 0.0
        %1143 = vmatprep.subr.mxu0 0.0
        %1144 = vmatpush2.xpose.msra.mxu0 0.0
        %1145 = vmatprep.subr.mxu0 0.0
        %1146 = vmatpush2.xpose.msra.mxu0 0.0
        %1147 = vmatprep.subr.mxu0 0.0
        %1148 = vmatpush2.xpose.msra.mxu0 0.0
        %1149 = vmatprep.subr.mxu0 0.0
        %1150 = vmatpush2.xpose.msra.mxu0 0.0
        %1151 = vmatprep.subr.mxu0 0.0
        %1152 = vmatpush2.xpose.msra.mxu0 0.0
        %1153 = vmatprep.subr.mxu0 0.0
        %1154 = vmatpush2.xpose.msra.mxu0 0.0
        %1155 = vmatprep.subr.mxu0 0.0
        %1156 = vmatpush2.xpose.msra.mxu0 0.0
        %1157 = vmatprep.subr.mxu0 0.0
        %1158 = vmatpush2.xpose.msra.mxu0 0.0
        %1159 = vmatprep.mubr.f32.mxu0 0.0
        %1160 = vmatmul.mubr.f32.gmra.mxu0 %v1090
        %v1161 = vpop.f32.mrf.mxu0
        %v1162 = vadd.f32 0.0, %v1161
        %v1163 = vpop.f32.mrf.mxu0
        %1164 = vdwg.mxu0
        %v1166 = vsel %vm474, %v1162, 0
        %1168 = vmatprep.subr.mxu0 0.0
        %1169 = vmatpush1.msra.mxu0 0.0
        %1170 = vmatprep.subr.mxu0 0.0
        %1171 = vmatpush1.msra.mxu0 0.0
        %1172 = vmatprep.subr.mxu0 0.0
        %1173 = vmatpush1.msra.mxu0 0.0
        %1174 = vmatprep.subr.mxu0 0.0
        %1175 = vmatpush1.msra.mxu0 0.0
        %1176 = vmatprep.subr.mxu0 0.0
        %1177 = vmatpush1.msra.mxu0 0.0
        %1178 = vmatprep.subr.mxu0 0.0
        %1179 = vmatpush1.msra.mxu0 0.0
        %1180 = vmatprep.subr.mxu0 0.0
        %1181 = vmatpush1.msra.mxu0 0.0
        %1182 = vmatprep.subr.mxu0 0.0
        %1183 = vmatpush1.msra.mxu0 0.0
        %1184 = vmatprep.subr.mxu0 0.0
        %1185 = vmatpush1.msra.mxu0 0.0
        %1186 = vmatprep.subr.mxu0 0.0
        %1187 = vmatpush1.msra.mxu0 0.0
        %1188 = vmatprep.subr.mxu0 0.0
        %1189 = vmatpush1.msra.mxu0 0.0
        %1190 = vmatprep.subr.mxu0 0.0
        %1191 = vmatpush1.msra.mxu0 0.0
        %1192 = vmatprep.subr.mxu0 0.0
        %1193 = vmatpush1.msra.mxu0 0.0
        %1194 = vmatprep.subr.mxu0 0.0
        %1195 = vmatpush1.msra.mxu0 0.0
        %1196 = vmatprep.subr.mxu0 0.0
        %1197 = vmatpush1.msra.mxu0 0.0
        %1198 = vmatprep.subr.mxu0 0.0
        %1199 = vmatpush1.msra.mxu0 %v440
        %1200 = vmatprep.subr.mxu0 0.0
        %1201 = vmatpush2.msra.mxu0 0.0
        %1202 = vmatprep.subr.mxu0 0.0
        %1203 = vmatpush2.msra.mxu0 0.0
        %1204 = vmatprep.subr.mxu0 0.0
        %1205 = vmatpush2.msra.mxu0 0.0
        %1206 = vmatprep.subr.mxu0 0.0
        %1207 = vmatpush2.msra.mxu0 0.0
        %1208 = vmatprep.subr.mxu0 0.0
        %1209 = vmatpush2.msra.mxu0 0.0
        %1210 = vmatprep.subr.mxu0 0.0
        %1211 = vmatpush2.msra.mxu0 0.0
        %1212 = vmatprep.subr.mxu0 0.0
        %1213 = vmatpush2.msra.mxu0 0.0
        %1214 = vmatprep.subr.mxu0 0.0
        %1215 = vmatpush2.msra.mxu0 0.0
        %1216 = vmatprep.subr.mxu0 0.0
        %1217 = vmatpush2.msra.mxu0 0.0
        %1218 = vmatprep.subr.mxu0 0.0
        %1219 = vmatpush2.msra.mxu0 0.0
        %1220 = vmatprep.subr.mxu0 0.0
        %1221 = vmatpush2.msra.mxu0 0.0
        %1222 = vmatprep.subr.mxu0 0.0
        %1223 = vmatpush2.msra.mxu0 0.0
        %1224 = vmatprep.subr.mxu0 0.0
        %1225 = vmatpush2.msra.mxu0 0.0
        %1226 = vmatprep.subr.mxu0 0.0
        %1227 = vmatpush2.msra.mxu0 0.0
        %1228 = vmatprep.subr.mxu0 0.0
        %1229 = vmatpush2.msra.mxu0 0.0
        %1230 = vmatprep.subr.mxu0 0.0
        %1231 = vmatpush2.msra.mxu0 0.0
        %1232 = vmatprep.mubr.f32.mxu0 0.0
        %1233 = vmatmul.mubr.f32.gmra.mxu0 %v1166
        %v1234 = vpop.f32.mrf.mxu0
        %v1235 = vadd.f32 0.0, %v1234
        %v1236 = vpop.f32.mrf.mxu0
        %1237 = vdwg.mxu0
        %v1238 = vadd.f32 %v970, %v1235
        %1239 = vxpose.xlu0.b32.start [1/16] %v389, 128
        %1240 = vxpose.xlu0.b32.cont [2/16] 0.0, 128
        %1241 = vxpose.xlu0.b32.cont [3/16] 0.0, 128
        %1242 = vxpose.xlu0.b32.cont [4/16] 0.0, 128
        %1243 = vxpose.xlu0.b32.cont [5/16] 0.0, 128
        %1244 = vxpose.xlu0.b32.cont [6/16] 0.0, 128
        %1245 = vxpose.xlu0.b32.cont [7/16] 0.0, 128
        %1246 = vxpose.xlu0.b32.cont [8/16] 0.0, 128
        %1247 = vxpose.xlu0.b32.cont [9/16] 0.0, 128
        %1248 = vxpose.xlu0.b32.cont [10/16] 0.0, 128
        %1249 = vxpose.xlu0.b32.cont [11/16] 0.0, 128
        %1250 = vxpose.xlu0.b32.cont [12/16] 0.0, 128
        %1251 = vxpose.xlu0.b32.cont [13/16] 0.0, 128
        %1252 = vxpose.xlu0.b32.cont [14/16] 0.0, 128
        %1253 = vxpose.xlu0.b32.cont [15/16] 0.0, 128
        %1254 = vxpose.xlu0.b32.end [16/16] 0.0, 128
        %v1255 = vpop.trf.xlu0
        %v1256 = vpop.trf.xlu0
        %v1257 = vpop.trf.xlu0
        %v1258 = vpop.trf.xlu0
        %v1259 = vpop.trf.xlu0
        %v1260 = vpop.trf.xlu0
        %v1261 = vpop.trf.xlu0
        %v1262 = vpop.trf.xlu0
        %v1263 = vpop.trf.xlu0
        %v1264 = vpop.trf.xlu0
        %v1265 = vpop.trf.xlu0
        %v1266 = vpop.trf.xlu0
        %v1267 = vpop.trf.xlu0
        %v1268 = vpop.trf.xlu0
        %v1269 = vpop.trf.xlu0
        %v1270 = vpop.trf.xlu0
        %v1272 = vsel %vm474, %v1255, 0
        %1274 = vmatprep.subr.mxu0 0.0
        %1275 = vmatpush1.msra.mxu0 0.0
        %1276 = vmatprep.subr.mxu0 0.0
        %1277 = vmatpush1.msra.mxu0 0.0
        %1278 = vmatprep.subr.mxu0 0.0
        %1279 = vmatpush1.msra.mxu0 0.0
        %1280 = vmatprep.subr.mxu0 0.0
        %1281 = vmatpush1.msra.mxu0 0.0
        %1282 = vmatprep.subr.mxu0 0.0
        %1283 = vmatpush1.msra.mxu0 0.0
        %1284 = vmatprep.subr.mxu0 0.0
        %1285 = vmatpush1.msra.mxu0 0.0
        %1286 = vmatprep.subr.mxu0 0.0
        %1287 = vmatpush1.msra.mxu0 0.0
        %1288 = vmatprep.subr.mxu0 0.0
        %1289 = vmatpush1.msra.mxu0 0.0
        %1290 = vmatprep.subr.mxu0 0.0
        %1291 = vmatpush1.msra.mxu0 0.0
        %1292 = vmatprep.subr.mxu0 0.0
        %1293 = vmatpush1.msra.mxu0 0.0
        %1294 = vmatprep.subr.mxu0 0.0
        %1295 = vmatpush1.msra.mxu0 0.0
        %1296 = vmatprep.subr.mxu0 0.0
        %1297 = vmatpush1.msra.mxu0 0.0
        %1298 = vmatprep.subr.mxu0 0.0
        %1299 = vmatpush1.msra.mxu0 0.0
        %1300 = vmatprep.subr.mxu0 0.0
        %1301 = vmatpush1.msra.mxu0 0.0
        %1302 = vmatprep.subr.mxu0 0.0
        %1303 = vmatpush1.msra.mxu0 0.0
        %1304 = vmatprep.subr.mxu0 0.0
        %1305 = vmatpush1.msra.mxu0 %v409
        %1306 = vmatprep.subr.mxu0 0.0
        %1307 = vmatpush2.msra.mxu0 0.0
        %1308 = vmatprep.subr.mxu0 0.0
        %1309 = vmatpush2.msra.mxu0 0.0
        %1310 = vmatprep.subr.mxu0 0.0
        %1311 = vmatpush2.msra.mxu0 0.0
        %1312 = vmatprep.subr.mxu0 0.0
        %1313 = vmatpush2.msra.mxu0 0.0
        %1314 = vmatprep.subr.mxu0 0.0
        %1315 = vmatpush2.msra.mxu0 0.0
        %1316 = vmatprep.subr.mxu0 0.0
        %1317 = vmatpush2.msra.mxu0 0.0
        %1318 = vmatprep.subr.mxu0 0.0
        %1319 = vmatpush2.msra.mxu0 0.0
        %1320 = vmatprep.subr.mxu0 0.0
        %1321 = vmatpush2.msra.mxu0 0.0
        %1322 = vmatprep.subr.mxu0 0.0
        %1323 = vmatpush2.msra.mxu0 0.0
        %1324 = vmatprep.subr.mxu0 0.0
        %1325 = vmatpush2.msra.mxu0 0.0
        %1326 = vmatprep.subr.mxu0 0.0
        %1327 = vmatpush2.msra.mxu0 0.0
        %1328 = vmatprep.subr.mxu0 0.0
        %1329 = vmatpush2.msra.mxu0 0.0
        %1330 = vmatprep.subr.mxu0 0.0
        %1331 = vmatpush2.msra.mxu0 0.0
        %1332 = vmatprep.subr.mxu0 0.0
        %1333 = vmatpush2.msra.mxu0 0.0
        %1334 = vmatprep.subr.mxu0 0.0
        %1335 = vmatpush2.msra.mxu0 0.0
        %1336 = vmatprep.subr.mxu0 0.0
        %1337 = vmatpush2.msra.mxu0 0.0
        %1338 = vmatprep.mubr.f32.mxu0 0.0
        %1339 = vmatmul.mubr.f32.gmra.mxu0 %v1272
        %v1340 = vpop.f32.mrf.mxu0
        %v1341 = vadd.f32 %v437, %v1340
        %v1342 = vpop.f32.mrf.mxu0
        %1343 = vdwg.mxu0
        %v1344 = vsel %vm474, %v1341, -inf
        %1345 = vmax.xlane.f32.xlu0 %v1344
        %v1346 = vpop.xlane.xlu0 %1345
        %v1347 = vsub.f32 %v1341, %v1346
        %v1348 = vmul.f32 %v1347, 1.442695
        %v1349 = vpow.pop %v1348
        %v1350 = vsel %vm474, %v1349, 0.0
        %1351 = vadd.xlane.f32.xlu0 %v1350
        %v1352 = vpop.xlane.xlu0 %1351
        %v1353 = vrcp.pop %v1352
        %v1354 = vmul.f32 %v1349, %v1353
        %v1356 = vsel %vm474, %v1354, 0
        %v1359 = vsel %vm474, %v429, 0
        %1361 = vmatprep.subr.mxu0 0.0
        %1362 = vmatpush1.xpose.msra.mxu0 0.0
        %1363 = vmatprep.subr.mxu0 0.0
        %1364 = vmatpush1.xpose.msra.mxu0 0.0
        %1365 = vmatprep.subr.mxu0 0.0
        %1366 = vmatpush1.xpose.msra.mxu0 0.0
        %1367 = vmatprep.subr.mxu0 0.0
        %1368 = vmatpush1.xpose.msra.mxu0 0.0
        %1369 = vmatprep.subr.mxu0 0.0
        %1370 = vmatpush1.xpose.msra.mxu0 0.0
        %1371 = vmatprep.subr.mxu0 0.0
        %1372 = vmatpush1.xpose.msra.mxu0 0.0
        %1373 = vmatprep.subr.mxu0 0.0
        %1374 = vmatpush1.xpose.msra.mxu0 0.0
        %1375 = vmatprep.subr.mxu0 0.0
        %1376 = vmatpush1.xpose.msra.mxu0 0.0
        %1377 = vmatprep.subr.mxu0 0.0
        %1378 = vmatpush1.xpose.msra.mxu0 0.0
        %1379 = vmatprep.subr.mxu0 0.0
        %1380 = vmatpush1.xpose.msra.mxu0 0.0
        %1381 = vmatprep.subr.mxu0 0.0
        %1382 = vmatpush1.xpose.msra.mxu0 0.0
        %1383 = vmatprep.subr.mxu0 0.0
        %1384 = vmatpush1.xpose.msra.mxu0 0.0
        %1385 = vmatprep.subr.mxu0 0.0
        %1386 = vmatpush1.xpose.msra.mxu0 0.0
        %1387 = vmatprep.subr.mxu0 0.0
        %1388 = vmatpush1.xpose.msra.mxu0 0.0
        %1389 = vmatprep.subr.mxu0 0.0
        %1390 = vmatpush1.xpose.msra.mxu0 0.0
        %1391 = vmatprep.subr.mxu0 0.0
        %1392 = vmatpush1.xpose.msra.mxu0 %v1359
        %1393 = vmatprep.subr.mxu0 0.0
        %1394 = vmatpush2.xpose.msra.mxu0 0.0
        %1395 = vmatprep.subr.mxu0 0.0
        %1396 = vmatpush2.xpose.msra.mxu0 0.0
        %1397 = vmatprep.subr.mxu0 0.0
        %1398 = vmatpush2.xpose.msra.mxu0 0.0
        %1399 = vmatprep.subr.mxu0 0.0
        %1400 = vmatpush2.xpose.msra.mxu0 0.0
        %1401 = vmatprep.subr.mxu0 0.0
        %1402 = vmatpush2.xpose.msra.mxu0 0.0
        %1403 = vmatprep.subr.mxu0 0.0
        %1404 = vmatpush2.xpose.msra.mxu0 0.0
        %1405 = vmatprep.subr.mxu0 0.0
        %1406 = vmatpush2.xpose.msra.mxu0 0.0
        %1407 = vmatprep.subr.mxu0 0.0
        %1408 = vmatpush2.xpose.msra.mxu0 0.0
        %1409 = vmatprep.subr.mxu0 0.0
        %1410 = vmatpush2.xpose.msra.mxu0 0.0
        %1411 = vmatprep.subr.mxu0 0.0
        %1412 = vmatpush2.xpose.msra.mxu0 0.0
        %1413 = vmatprep.subr.mxu0 0.0
        %1414 = vmatpush2.xpose.msra.mxu0 0.0
        %1415 = vmatprep.subr.mxu0 0.0
        %1416 = vmatpush2.xpose.msra.mxu0 0.0
        %1417 = vmatprep.subr.mxu0 0.0
        %1418 = vmatpush2.xpose.msra.mxu0 0.0
        %1419 = vmatprep.subr.mxu0 0.0
        %1420 = vmatpush2.xpose.msra.mxu0 0.0
        %1421 = vmatprep.subr.mxu0 0.0
        %1422 = vmatpush2.xpose.msra.mxu0 0.0
        %1423 = vmatprep.subr.mxu0 0.0
        %1424 = vmatpush2.xpose.msra.mxu0 0.0
        %1425 = vmatprep.mubr.f32.mxu0 0.0
        %1426 = vmatmul.mubr.f32.gmra.mxu0 %v1356
        %v1427 = vpop.f32.mrf.mxu0
        %v1428 = vadd.f32 0.0, %v1427
        %v1429 = vpop.f32.mrf.mxu0
        %1430 = vdwg.mxu0
        %v1432 = vsel %vm474, %v1428, 0
        %1434 = vmatprep.subr.mxu0 0.0
        %1435 = vmatpush1.msra.mxu0 0.0
        %1436 = vmatprep.subr.mxu0 0.0
        %1437 = vmatpush1.msra.mxu0 0.0
        %1438 = vmatprep.subr.mxu0 0.0
        %1439 = vmatpush1.msra.mxu0 0.0
        %1440 = vmatprep.subr.mxu0 0.0
        %1441 = vmatpush1.msra.mxu0 0.0
        %1442 = vmatprep.subr.mxu0 0.0
        %1443 = vmatpush1.msra.mxu0 0.0
        %1444 = vmatprep.subr.mxu0 0.0
        %1445 = vmatpush1.msra.mxu0 0.0
        %1446 = vmatprep.subr.mxu0 0.0
        %1447 = vmatpush1.msra.mxu0 0.0
        %1448 = vmatprep.subr.mxu0 0.0
        %1449 = vmatpush1.msra.mxu0 0.0
        %1450 = vmatprep.subr.mxu0 0.0
        %1451 = vmatpush1.msra.mxu0 0.0
        %1452 = vmatprep.subr.mxu0 0.0
        %1453 = vmatpush1.msra.mxu0 0.0
        %1454 = vmatprep.subr.mxu0 0.0
        %1455 = vmatpush1.msra.mxu0 0.0
        %1456 = vmatprep.subr.mxu0 0.0
        %1457 = vmatpush1.msra.mxu0 0.0
        %1458 = vmatprep.subr.mxu0 0.0
        %1459 = vmatpush1.msra.mxu0 0.0
        %1460 = vmatprep.subr.mxu0 0.0
        %1461 = vmatpush1.msra.mxu0 0.0
        %1462 = vmatprep.subr.mxu0 0.0
        %1463 = vmatpush1.msra.mxu0 0.0
        %1464 = vmatprep.subr.mxu0 0.0
        %1465 = vmatpush1.msra.mxu0 %v441
        %1466 = vmatprep.subr.mxu0 0.0
        %1467 = vmatpush2.msra.mxu0 0.0
        %1468 = vmatprep.subr.mxu0 0.0
        %1469 = vmatpush2.msra.mxu0 0.0
        %1470 = vmatprep.subr.mxu0 0.0
        %1471 = vmatpush2.msra.mxu0 0.0
        %1472 = vmatprep.subr.mxu0 0.0
        %1473 = vmatpush2.msra.mxu0 0.0
        %1474 = vmatprep.subr.mxu0 0.0
        %1475 = vmatpush2.msra.mxu0 0.0
        %1476 = vmatprep.subr.mxu0 0.0
        %1477 = vmatpush2.msra.mxu0 0.0
        %1478 = vmatprep.subr.mxu0 0.0
        %1479 = vmatpush2.msra.mxu0 0.0
        %1480 = vmatprep.subr.mxu0 0.0
        %1481 = vmatpush2.msra.mxu0 0.0
        %1482 = vmatprep.subr.mxu0 0.0
        %1483 = vmatpush2.msra.mxu0 0.0
        %1484 = vmatprep.subr.mxu0 0.0
        %1485 = vmatpush2.msra.mxu0 0.0
        %1486 = vmatprep.subr.mxu0 0.0
        %1487 = vmatpush2.msra.mxu0 0.0
        %1488 = vmatprep.subr.mxu0 0.0
        %1489 = vmatpush2.msra.mxu0 0.0
        %1490 = vmatprep.subr.mxu0 0.0
        %1491 = vmatpush2.msra.mxu0 0.0
        %1492 = vmatprep.subr.mxu0 0.0
        %1493 = vmatpush2.msra.mxu0 0.0
        %1494 = vmatprep.subr.mxu0 0.0
        %1495 = vmatpush2.msra.mxu0 0.0
        %1496 = vmatprep.subr.mxu0 0.0
        %1497 = vmatpush2.msra.mxu0 0.0
        %1498 = vmatprep.mubr.f32.mxu0 0.0
        %1499 = vmatmul.mubr.f32.gmra.mxu0 %v1432
        %v1500 = vpop.f32.mrf.mxu0
        %v1501 = vadd.f32 0.0, %v1500
        %v1502 = vpop.f32.mrf.mxu0
        %1503 = vdwg.mxu0
        %v1504 = vadd.f32 %v1238, %v1501
        %v1505 = vld [vmem:[%s6] sm:$0xff]
        %v1506 = vadd.f32 %v1504, %v254
        %v1507 = vsel %vm267, %v1506, 0.0
        %1508 = vadd.xlane.f32.xlu0 %v1507
        %v1509 = vpop.xlane.xlu0 %1508
        %v1510 = vrcp.pop 32.0
        %v1511 = vmul.f32 %v1509, %v1510
        %v1512 = vsub.f32 %v1506, %v1511
        %v1513 = vmul.f32 %v1512, %v1512
        %v1514 = vsel %vm267, %v1513, 0.0
        %1515 = vadd.xlane.f32.xlu0 %v1514
        %v1516 = vpop.xlane.xlu0 %1515
        %v1517 = vmul.f32 %v1516, %v1510
        %v1518 = vadd.f32 %v1517, 1e-05
        %v1519 = vrsqrt.pop %v1518
        %v1520 = vmul.f32 %v1512, %v1519
        %v1521 = vlaneseq
        %v1522 = vshrl.u32 %v1521, 7
        %v1523 = vsub.s32 0, %v1522
        %v1524 = vrot.slane %v1505, %v1523
        %v1525 = vmul.f32 %v1520, %v1524
        %v1526 = vlaneseq
        %v1527 = vshrl.u32 %v1526, 7
        %v1528 = vsub.s32 1, %v1527
        %v1529 = vrot.slane %v1505, %v1528
        %v1530 = vadd.f32 %v1525, %v1529
        %v1531 = vld [vmem:[%s4] sm:$0xff]
        %v1532 = vld [vmem:[%s4 + $0x8] sm:$0xff]
        %v1533 = vld [vmem:[%s4 + $0x10] sm:$0xff]
        %v1534 = vld [vmem:[%s4 + $0x18] sm:$0xff]
        %v1535 = vlaneseq
        %v1536 = vshrl.u32 %v1535, 7
        %v1537 = vsub.s32 5, %v1536
        %v1538 = vrot.slane %v1505, %v1537
        %v1540 = vsel %vm267, %v1530, 0
        %1542 = vmatprep.subr.mxu0 0.0
        %1543 = vmatpush1.msra.mxu0 0.0
        %1544 = vmatprep.subr.mxu0 0.0
        %1545 = vmatpush1.msra.mxu0 0.0
        %1546 = vmatprep.subr.mxu0 0.0
        %1547 = vmatpush1.msra.mxu0 0.0
        %1548 = vmatprep.subr.mxu0 0.0
        %1549 = vmatpush1.msra.mxu0 0.0
        %1550 = vmatprep.subr.mxu0 0.0
        %1551 = vmatpush1.msra.mxu0 0.0
        %1552 = vmatprep.subr.mxu0 0.0
        %1553 = vmatpush1.msra.mxu0 0.0
        %1554 = vmatprep.subr.mxu0 0.0
        %1555 = vmatpush1.msra.mxu0 0.0
        %1556 = vmatprep.subr.mxu0 0.0
        %1557 = vmatpush1.msra.mxu0 0.0
        %1558 = vmatprep.subr.mxu0 0.0
        %1559 = vmatpush1.msra.mxu0 0.0
        %1560 = vmatprep.subr.mxu0 0.0
        %1561 = vmatpush1.msra.mxu0 0.0
        %1562 = vmatprep.subr.mxu0 0.0
        %1563 = vmatpush1.msra.mxu0 0.0
        %1564 = vmatprep.subr.mxu0 0.0
        %1565 = vmatpush1.msra.mxu0 0.0
        %1566 = vmatprep.subr.mxu0 0.0
        %1567 = vmatpush1.msra.mxu0 %v1534
        %1568 = vmatprep.subr.mxu0 0.0
        %1569 = vmatpush1.msra.mxu0 %v1533
        %1570 = vmatprep.subr.mxu0 0.0
        %1571 = vmatpush1.msra.mxu0 %v1532
        %1572 = vmatprep.subr.mxu0 0.0
        %1573 = vmatpush1.msra.mxu0 %v1531
        %1574 = vmatprep.subr.mxu0 0.0
        %1575 = vmatpush2.msra.mxu0 0.0
        %1576 = vmatprep.subr.mxu0 0.0
        %1577 = vmatpush2.msra.mxu0 0.0
        %1578 = vmatprep.subr.mxu0 0.0
        %1579 = vmatpush2.msra.mxu0 0.0
        %1580 = vmatprep.subr.mxu0 0.0
        %1581 = vmatpush2.msra.mxu0 0.0
        %1582 = vmatprep.subr.mxu0 0.0
        %1583 = vmatpush2.msra.mxu0 0.0
        %1584 = vmatprep.subr.mxu0 0.0
        %1585 = vmatpush2.msra.mxu0 0.0
        %1586 = vmatprep.subr.mxu0 0.0
        %1587 = vmatpush2.msra.mxu0 0.0
        %1588 = vmatprep.subr.mxu0 0.0
        %1589 = vmatpush2.msra.mxu0 0.0
        %1590 = vmatprep.subr.mxu0 0.0
        %1591 = vmatpush2.msra.mxu0 0.0
        %1592 = vmatprep.subr.mxu0 0.0
        %1593 = vmatpush2.msra.mxu0 0.0
        %1594 = vmatprep.subr.mxu0 0.0
        %1595 = vmatpush2.msra.mxu0 0.0
        %1596 = vmatprep.subr.mxu0 0.0
        %1597 = vmatpush2.msra.mxu0 0.0
        %1598 = vmatprep.subr.mxu0 0.0
        %1599 = vmatpush2.msra.mxu0 0.0
        %1600 = vmatprep.subr.mxu0 0.0
        %1601 = vmatpush2.msra.mxu0 0.0
        %1602 = vmatprep.subr.mxu0 0.0
        %1603 = vmatpush2.msra.mxu0 0.0
        %1604 = vmatprep.subr.mxu0 0.0
        %1605 = vmatpush2.msra.mxu0 0.0
        %1606 = vmatprep.mubr.f32.mxu0 0.0
        %1607 = vmatmul.mubr.f32.gmra.mxu0 %v1540
        %v1608 = vpop.f32.mrf.mxu0
        %v1609 = vadd.f32 %v1538, %v1608
        %v1610 = vpop.f32.mrf.mxu0
        %1611 = vdwg.mxu0
        %v1612 = vmax.f32 %v1609, 0.0
        %v1613 = vld [vmem:[%s5] sm:$0xff]
        %v1614 = vld [vmem:[%s5 + $0x8] sm:$0xff]
        %v1615 = vld [vmem:[%s5 + $0x10] sm:$0xff]
        %v1616 = vld [vmem:[%s5 + $0x18] sm:$0xff]
        %v1617 = vld [vmem:[%s5 + $0x20] sm:$0xff]
        %v1618 = vld [vmem:[%s5 + $0x28] sm:$0xff]
        %v1619 = vld [vmem:[%s5 + $0x30] sm:$0xff]
        %v1620 = vld [vmem:[%s5 + $0x38] sm:$0xff]
        %v1621 = vlaneseq
        %v1622 = vshrl.u32 %v1621, 7
        %v1623 = vsub.s32 4, %v1622
        %v1624 = vrot.slane %v1505, %v1623
        %vm1625 = vcmask 523264
        %v1627 = vsel %vm1625, %v1612, 0
        %1629 = vmatprep.subr.mxu0 0.0
        %1630 = vmatpush1.msra.mxu0 0.0
        %1631 = vmatprep.subr.mxu0 0.0
        %1632 = vmatpush1.msra.mxu0 0.0
        %1633 = vmatprep.subr.mxu0 0.0
        %1634 = vmatpush1.msra.mxu0 0.0
        %1635 = vmatprep.subr.mxu0 0.0
        %1636 = vmatpush1.msra.mxu0 0.0
        %1637 = vmatprep.subr.mxu0 0.0
        %1638 = vmatpush1.msra.mxu0 0.0
        %1639 = vmatprep.subr.mxu0 0.0
        %1640 = vmatpush1.msra.mxu0 0.0
        %1641 = vmatprep.subr.mxu0 0.0
        %1642 = vmatpush1.msra.mxu0 0.0
        %1643 = vmatprep.subr.mxu0 0.0
        %1644 = vmatpush1.msra.mxu0 0.0
        %1645 = vmatprep.subr.mxu0 0.0
        %1646 = vmatpush1.msra.mxu0 %v1620
        %1647 = vmatprep.subr.mxu0 0.0
        %1648 = vmatpush1.msra.mxu0 %v1619
        %1649 = vmatprep.subr.mxu0 0.0
        %1650 = vmatpush1.msra.mxu0 %v1618
        %1651 = vmatprep.subr.mxu0 0.0
        %1652 = vmatpush1.msra.mxu0 %v1617
        %1653 = vmatprep.subr.mxu0 0.0
        %1654 = vmatpush1.msra.mxu0 %v1616
        %1655 = vmatprep.subr.mxu0 0.0
        %1656 = vmatpush1.msra.mxu0 %v1615
        %1657 = vmatprep.subr.mxu0 0.0
        %1658 = vmatpush1.msra.mxu0 %v1614
        %1659 = vmatprep.subr.mxu0 0.0
        %1660 = vmatpush1.msra.mxu0 %v1613
        %1661 = vmatprep.subr.mxu0 0.0
        %1662 = vmatpush2.msra.mxu0 0.0
        %1663 = vmatprep.subr.mxu0 0.0
        %1664 = vmatpush2.msra.mxu0 0.0
        %1665 = vmatprep.subr.mxu0 0.0
        %1666 = vmatpush2.msra.mxu0 0.0
        %1667 = vmatprep.subr.mxu0 0.0
        %1668 = vmatpush2.msra.mxu0 0.0
        %1669 = vmatprep.subr.mxu0 0.0
        %1670 = vmatpush2.msra.mxu0 0.0
        %1671 = vmatprep.subr.mxu0 0.0
        %1672 = vmatpush2.msra.mxu0 0.0
        %1673 = vmatprep.subr.mxu0 0.0
        %1674 = vmatpush2.msra.mxu0 0.0
        %1675 = vmatprep.subr.mxu0 0.0
        %1676 = vmatpush2.msra.mxu0 0.0
        %1677 = vmatprep.subr.mxu0 0.0
        %1678 = vmatpush2.msra.mxu0 0.0
        %1679 = vmatprep.subr.mxu0 0.0
        %1680 = vmatpush2.msra.mxu0 0.0
        %1681 = vmatprep.subr.mxu0 0.0
        %1682 = vmatpush2.msra.mxu0 0.0
        %1683 = vmatprep.subr.mxu0 0.0
        %1684 = vmatpush2.msra.mxu0 0.0
        %1685 = vmatprep.subr.mxu0 0.0
        %1686 = vmatpush2.msra.mxu0 0.0
        %1687 = vmatprep.subr.mxu0 0.0
        %1688 = vmatpush2.msra.mxu0 0.0
        %1689 = vmatprep.subr.mxu0 0.0
        %1690 = vmatpush2.msra.mxu0 0.0
        %1691 = vmatprep.subr.mxu0 0.0
        %1692 = vmatpush2.msra.mxu0 0.0
        %1693 = vmatprep.mubr.f32.mxu0 0.0
        %1694 = vmatmul.mubr.f32.gmra.mxu0 %v1627
        %v1695 = vpop.f32.mrf.mxu0
        %v1696 = vadd.f32 %v1624, %v1695
        %v1697 = vpop.f32.mrf.mxu0
        %1698 = vdwg.mxu0
        %v1699 = vadd.f32 %v1696, %v1530
        %v1700 = vsel %vm267, %v1699, 0.0
        %1701 = vadd.xlane.f32.xlu0 %v1700
        %v1702 = vpop.xlane.xlu0 %1701
        %v1703 = vmul.f32 %v1702, %v1510
        %v1704 = vsub.f32 %v1699, %v1703
        %v1705 = vmul.f32 %v1704, %v1704
        %v1706 = vsel %vm267, %v1705, 0.0
        %1707 = vadd.xlane.f32.xlu0 %v1706
        %v1708 = vpop.xlane.xlu0 %1707
        %v1709 = vmul.f32 %v1708, %v1510
        %v1710 = vadd.f32 %v1709, 1e-05
        %v1711 = vrsqrt.pop %v1710
        %v1712 = vmul.f32 %v1704, %v1711
        %v1713 = vlaneseq
        %v1714 = vshrl.u32 %v1713, 7
        %v1715 = vsub.s32 2, %v1714
        %v1716 = vrot.slane %v1505, %v1715
        %v1717 = vmul.f32 %v1712, %v1716
        %v1718 = vlaneseq
        %v1719 = vshrl.u32 %v1718, 7
        %v1720 = vsub.s32 3, %v1719
        %v1721 = vrot.slane %v1505, %v1720
        %v1722 = vadd.f32 %v1717, %v1721
        %1723 = vst.msk [vmem:[%s249] sm:$0xff] %vm267, %v1722
        %s1724 = sand.u32 %s166, 1
        %s1725 = scalar_lea.sflag [#allocation5], %s1724
        %s1726 = sand.u32 %s166, 1
        %s1727 = smul.addr %s1726, 8
        %s1728 = scalar_lea.vmem [#allocation4], %s1727
        // Predicated region
        $region45: #{tpu_custom_call.1} parent=43 // pred_check
          %p1729 = pneg %p176
        $region46: #{tpu_custom_call.1} parent=43 // pred_check_branch
          %1731 = sbr.rel (%p1729) target = $region48
        $region47: #{tpu_custom_call.1} parent=43 // pred_region
          %s1733 = ssub.s32 128, 128
          %1734 = vsyncadd %s1725, %s1733
          %s1735 = smul.addr %s27, 128
          %s1736 = scalar_lea.hbm %s7, %s1735
          %s1738 = sshll.u32 %s1728, 4
          %s1739 = int_to_ptr.vmem [resolvable:$true] %s1738
          %1741 = dma.vmem_to_hbm [thread:$0]  %s1739, 128, %s1736, %s1725
        $region48: #{tpu_custom_call.1} parent=43 // pred_fallthru
          _
      $region44: #{tpu_custom_call.1} parent=5 // pred_fallthru
        _
      %p1742 = scmp.le.s32.totalorder 2, %s22
      // Predicated region
      $region49: #{tpu_custom_call.1} parent=5 // pred_check
        %p1743 = pneg %p1742
      $region50: #{tpu_custom_call.1} parent=5 // pred_check_branch
        %1745 = sbr.rel (%p1743) target = $region52
      $region51: #{tpu_custom_call.1} parent=5 // pred_region
        %s1746 = ssub.s32 %s22, 2
        // Predicated region
        $region53: #{tpu_custom_call.1} parent=51 // pred_check
          %p1747 = pneg %p182
        $region54: #{tpu_custom_call.1} parent=51 // pred_check_branch
          %1749 = sbr.rel (%p1747) target = $region56
        $region55: #{tpu_custom_call.1} parent=51 // pred_region
          %s1750 = sand.u32 %s167, 1
          %s1751 = scalar_lea.sflag [#allocation5], %s1750
          %s1752 = sand.u32 %s167, 1
          %s1753 = smul.addr %s1752, 8
          %s1754 = scalar_lea.vmem [#allocation4], %s1753
          %1755 = dma.done %s1751, 128
        $region56: #{tpu_custom_call.1} parent=51 // pred_fallthru
          _
      $region52: #{tpu_custom_call.1} parent=5 // pred_fallthru
        _
    $region6: #{tpu_custom_call.1} parent=1 // loop_footer
      %s26 = sadd.s32 1, %s22
    $region7: #{tpu_custom_call.1} parent=1 // loop_footer_branch
      %21 = sbr.rel target = $region3
    $region8: #{tpu_custom_call.1} parent=1 // loop_exit
      _
    %1756 = vsyncpa [#allocation5], 1
    %s1757 = scalar_lea.sflag [#allocation5], 1
    %1758 = vsyncpa %s1757, 1

</llo_original>
